<compile_context>
chip_gen: v7x
topology: tpu7x:2x2x1
jax: 0.10.0
libtpu: 0.0.40
codegen_flags: <defaults>
</compile_context>

<pallas_src>
import math
import jax
import jax.numpy as jnp
from jax.experimental import pallas as pl
from jax.experimental.pallas import tpu as pltpu

# ---------------- configuration (small, consistent with a BERT NER model) ----
B = 2            # batch
S = 8            # sequence length
H = 32           # hidden size
NH = 2           # attention heads
HD = H // NH     # head dim
I = 64           # FFN intermediate size
L = 2            # encoder layers
V = 100          # vocab size
C = 5            # num NER labels
CPAD = 128       # lane-dense padded classifier width (sliced back to C outside)
MAXPOS = 16      # max position embeddings
LN_EPS = 1e-12   # BERT layernorm eps

BS = B * S       # flattened token rows


# ---------------- in-kernel helpers ------------------------------------------
def _layernorm(x, gamma, beta):
    mu = jnp.mean(x, axis=-1, keepdims=True)
    var = jnp.mean((x - mu) ** 2, axis=-1, keepdims=True)
    return (x - mu) * jax.lax.rsqrt(var + LN_EPS) * gamma + beta


# ---------------- fused Pallas kernel -----------------------------------------
def bert_ner_kernel(emb_ref, bias_ref, eg_ref, eb_ref,
                    wqkv_ref, bqkv_ref, wo_ref, bo_ref,
                    l1g_ref, l1b_ref, w1_ref, b1_ref, w2_ref, b2_ref,
                    l2g_ref, l2b_ref, cw_ref, cb_ref, out_ref):
    f32 = jnp.float32
    bf16 = jnp.bfloat16

    # --- embeddings LayerNorm (f32) ---
    x = _layernorm(emb_ref[...], eg_ref[...], eb_ref[...])          # (BS, H) f32
    attn_bias = bias_ref[...]                                       # (B, 1, S) f32

    # --- encoder layers (static unroll over L) ---
    for l in range(L):
        # fused QKV projection: one flat matmul, bf16 in / f32 acc, fused bias row
        qkv = jnp.dot(x.astype(bf16), wqkv_ref[l],
                      preferred_element_type=f32) + bqkv_ref[l]      # (BS, 3H)

        # per-head attention (static unroll over NH heads; 1/sqrt(HD) folded in Wq/bq)
        ctx_heads = []
        for h in range(NH):
            qh = qkv[:, h * HD:(h + 1) * HD].reshape(B, S, HD).astype(bf16)
            kh = qkv[:, H + h * HD:H + (h + 1) * HD].reshape(B, S, HD).astype(bf16)
            vh = qkv[:, 2 * H + h * HD:2 * H + (h + 1) * HD].reshape(B, S, HD).astype(bf16)

            s = jnp.einsum('bqd,bkd->bqk', qh, kh,
                           preferred_element_type=f32) + attn_bias   # (B, S, S)
            s = s - jnp.max(s, axis=-1, keepdims=True)
            p = jnp.exp(s)
            p = p * pl.reciprocal(jnp.sum(p, axis=-1, keepdims=True), approx=True)

            ch = jnp.einsum('bqk,bkd->bqd', p.astype(bf16), vh,
                            preferred_element_type=f32)              # (B, S, HD)
            ctx_heads.append(ch.reshape(BS, HD))

        ctx = jnp.concatenate(ctx_heads, axis=-1)                    # (BS, NH*HD = H)

        # flat output projection: cross-head sum folded into the MXU contraction
        attn = jnp.dot(ctx.astype(bf16), wo_ref[l],
                       preferred_element_type=f32) + bo_ref[l]       # (BS, H)

        x1 = _layernorm(x + attn, l1g_ref[l], l1b_ref[l])            # (BS, H) f32

        # FFN (bf16 matmuls, f32 elementwise; tanh GELU -> EUP)
        h1 = jnp.dot(x1.astype(bf16), w1_ref[l],
                     preferred_element_type=f32) + b1_ref[l]         # (BS, I)
        h1 = jax.nn.gelu(h1, approximate=True)
        ffn = jnp.dot(h1.astype(bf16), w2_ref[l],
                      preferred_element_type=f32) + b2_ref[l]        # (BS, H)
        x = _layernorm(x1 + ffn, l2g_ref[l], l2b_ref[l])

    # --- token-classification head, lane-dense (BS, 128) output ---
    out_ref[...] = jnp.dot(x.astype(bf16), cw_ref[...],
                           preferred_element_type=f32) + cb_ref[...]


# ---------------- parameter construction (deterministic, synthetic) -----------
def make_params(key):
    ks = iter(jax.random.split(key, 64))

    def normal(shape):
        return (0.02 * jax.random.normal(next(ks), shape)).astype(jnp.float32)

    params = {
        "word_emb": normal((V, H)),
        "pos_emb": normal((MAXPOS, H)),
        "type_emb": normal((2, H)),
        "emb_ln_g": jnp.ones((1, H), jnp.float32),
        "emb_ln_b": jnp.zeros((1, H), jnp.float32),
        "cls_w": normal((H, C)),
        "cls_b": jnp.zeros((1, C), jnp.float32),
        "layers": [],
    }
    for _ in range(L):
        layer = [
            normal((H, H)), jnp.zeros((1, H), jnp.float32),   # Wq, bq
            normal((H, H)), jnp.zeros((1, H), jnp.float32),   # Wk, bk
            normal((H, H)), jnp.zeros((1, H), jnp.float32),   # Wv, bv
            normal((H, H)), jnp.zeros((1, H), jnp.float32),   # Wo, bo
            jnp.ones((1, H), jnp.float32), jnp.zeros((1, H), jnp.float32),  # LN1
            normal((H, I)), jnp.zeros((1, I), jnp.float32),   # W1, b1
            normal((I, H)), jnp.zeros((1, H), jnp.float32),   # W2, b2
            jnp.ones((1, H), jnp.float32), jnp.zeros((1, H), jnp.float32),  # LN2
        ]
        params["layers"].append(layer)
    return params


def prepare_fused_inputs(params):
    """One-time weight re-layout for the fused kernel (plain JAX, outside kernel)."""
    scale = 1.0 / math.sqrt(HD)     # power of two -> exact fold into Wq/bq
    Ls = params["layers"]

    wqkv, bqkv = [], []
    for lp in Ls:
        wq, bq, wk, bk, wv, bv = lp[0], lp[1], lp[2], lp[3], lp[4], lp[5]
        # fused (H, 3H) weight and single (1, 3H) bias row; Q columns pre-scaled
        wqkv.append(jnp.concatenate([wq * scale, wk, wv], axis=1))
        bqkv.append(jnp.concatenate([bq * scale, bk, bv], axis=1))

    def stk(xs, dt=jnp.float32):
        return jnp.stack(xs).astype(dt)

    fused = {
        "wqkv": stk(wqkv, jnp.bfloat16),                      # (L, H, 3H)
        "bqkv": stk(bqkv),                                    # (L, 1, 3H)
        "wo":   stk([lp[6] for lp in Ls], jnp.bfloat16),      # (L, H, H)
        "bo":   stk([lp[7] for lp in Ls]),
        "l1g":  stk([lp[8] for lp in Ls]),
        "l1b":  stk([lp[9] for lp in Ls]),
        "w1":   stk([lp[10] for lp in Ls], jnp.bfloat16),     # (L, H, I)
        "b1":   stk([lp[11] for lp in Ls]),
        "w2":   stk([lp[12] for lp in Ls], jnp.bfloat16),     # (L, I, H)
        "b2":   stk([lp[13] for lp in Ls]),
        "l2g":  stk([lp[14] for lp in Ls]),
        "l2b":  stk([lp[15] for lp in Ls]),
    }
    # lane-dense classifier: zero-padded columns C..CPAD are sliced off outside
    cw = jnp.zeros((H, CPAD), jnp.float32).at[:, :C].set(params["cls_w"])
    cb = jnp.zeros((1, CPAD), jnp.float32).at[:, :C].set(params["cls_b"])
    fused["cw"] = cw.astype(jnp.bfloat16)
    fused["cb"] = cb
    return fused


# ---------------- full forward (== BertNERWrapper.forward -> logits) ----------
def bert_ner_forward(params, fused, input_ids, attention_mask):
    # Embedding gather (glue, plain JAX).
    # TODO(synk): could be fused via PrefetchScalarGridSpec + pl.Element row-gather.
    emb = (params["word_emb"][input_ids]
           + params["pos_emb"][:S][None, :, :]
           + params["type_emb"][0][None, None, :]).astype(jnp.float32)
    emb_flat = emb.reshape(BS, H)

    # HF-style additive attention bias, computed once, per batch row (shared by heads).
    mask_f = attention_mask.astype(jnp.float32)                    # (B, S)
    attn_bias = ((mask_f - 1.0) * 1e9)[:, None, :]                 # (B, 1, S)

    args = (emb_flat, attn_bias, params["emb_ln_g"], params["emb_ln_b"],
            fused["wqkv"], fused["bqkv"], fused["wo"], fused["bo"],
            fused["l1g"], fused["l1b"], fused["w1"], fused["b1"],
            fused["w2"], fused["b2"], fused["l2g"], fused["l2b"],
            fused["cw"], fused["cb"])

    out = pl.pallas_call(
        bert_ner_kernel,
        in_specs=[pl.BlockSpec(memory_space=pltpu.MemorySpace.VMEM)] * len(args),
        out_specs=pl.BlockSpec(memory_space=pltpu.MemorySpace.VMEM),
        out_shape=jax.ShapeDtypeStruct((BS, CPAD), jnp.float32),
    )(*args)

    # slice the lane-dense slab back to the real label count
    return out.reshape(B, S, CPAD)[:, :, :C]


# ---------------- main ---------------------------------------------------------
if __name__ == "__main__":
    key = jax.random.PRNGKey(0)
    k_param, k_ids = jax.random.split(key)

    params = make_params(k_param)
    fused = prepare_fused_inputs(params)

    input_ids = jax.random.randint(k_ids, (B, S), minval=0, maxval=V, dtype=jnp.int32)
    attention_mask = jnp.ones((B, S), dtype=jnp.int32).at[1, 6:].set(0)  # some padding

    forward = jax.jit(bert_ner_forward)
    logits = forward(params, fused, input_ids, attention_mask)
    jax.block_until_ready(logits)

    assert logits.shape == (B, S, C) and logits.dtype == jnp.float32
    assert bool(jnp.all(jnp.isfinite(logits)))
    print("KERNEL_OK")
</pallas_src>

<mosaic_0001>
module attributes {stable_mosaic.version = 11 : i64} {
  func.func @bert_ner_kernel(%arg0: memref<16x32xf32, #tpu.memory_space<vmem>>, %arg1: memref<2x1x8xf32, #tpu.memory_space<vmem>>, %arg2: memref<1x32xf32, #tpu.memory_space<vmem>>, %arg3: memref<1x32xf32, #tpu.memory_space<vmem>>, %arg4: memref<2x32x96xbf16, #tpu.memory_space<vmem>>, %arg5: memref<2x1x96xf32, #tpu.memory_space<vmem>>, %arg6: memref<2x32x32xbf16, #tpu.memory_space<vmem>>, %arg7: memref<2x1x32xf32, #tpu.memory_space<vmem>>, %arg8: memref<2x1x32xf32, #tpu.memory_space<vmem>>, %arg9: memref<2x1x32xf32, #tpu.memory_space<vmem>>, %arg10: memref<2x32x64xbf16, #tpu.memory_space<vmem>>, %arg11: memref<2x1x64xf32, #tpu.memory_space<vmem>>, %arg12: memref<2x64x32xbf16, #tpu.memory_space<vmem>>, %arg13: memref<2x1x32xf32, #tpu.memory_space<vmem>>, %arg14: memref<2x1x32xf32, #tpu.memory_space<vmem>>, %arg15: memref<2x1x32xf32, #tpu.memory_space<vmem>>, %arg16: memref<32x128xbf16, #tpu.memory_space<vmem>>, %arg17: memref<1x128xf32, #tpu.memory_space<vmem>>, %arg18: memref<16x128xf32, #tpu.memory_space<vmem>>) attributes {dimension_semantics = [], scalar_prefetch = 0 : i64, scratch_operands = 0 : i64, tpu.core_type = #tpu.core_type<tc>} {
    %c0 = arith.constant 0 : index
    %c0_0 = arith.constant 0 : index
    %0 = vector.load %arg0[%c0, %c0_0] : memref<16x32xf32, #tpu.memory_space<vmem>>, vector<16x32xf32>
    %c0_1 = arith.constant 0 : index
    %c0_2 = arith.constant 0 : index
    %1 = vector.load %arg2[%c0_1, %c0_2] : memref<1x32xf32, #tpu.memory_space<vmem>>, vector<1x32xf32>
    %c0_3 = arith.constant 0 : index
    %c0_4 = arith.constant 0 : index
    %2 = vector.load %arg3[%c0_3, %c0_4] : memref<1x32xf32, #tpu.memory_space<vmem>>, vector<1x32xf32>
    %cst = arith.constant dense<0.000000e+00> : vector<16xf32>
    %3 = vector.multi_reduction <add>, %0, %cst [1] : vector<16x32xf32> to vector<16xf32>
    %4 = vector.shape_cast %3 : vector<16xf32> to vector<16x1xf32>
    %cst_5 = arith.constant 3.200000e+01 : f32
    %5 = vector.broadcast %cst_5 : f32 to vector<16x1xf32>
    %6 = arith.divf %4, %5 : vector<16x1xf32>
    %7 = vector.broadcast %6 : vector<16x1xf32> to vector<16x32xf32>
    %8 = arith.subf %0, %7 : vector<16x32xf32>
    %9 = arith.mulf %8, %8 : vector<16x32xf32>
    %cst_6 = arith.constant dense<0.000000e+00> : vector<16xf32>
    %10 = vector.multi_reduction <add>, %9, %cst_6 [1] : vector<16x32xf32> to vector<16xf32>
    %11 = vector.shape_cast %10 : vector<16xf32> to vector<16x1xf32>
    %cst_7 = arith.constant 3.200000e+01 : f32
    %12 = vector.broadcast %cst_7 : f32 to vector<16x1xf32>
    %13 = arith.divf %11, %12 : vector<16x1xf32>
    %14 = vector.broadcast %6 : vector<16x1xf32> to vector<16x32xf32>
    %15 = arith.subf %0, %14 : vector<16x32xf32>
    %cst_8 = arith.constant 9.99999996E-13 : f32
    %16 = vector.broadcast %cst_8 : f32 to vector<16x1xf32>
    %17 = arith.addf %13, %16 : vector<16x1xf32>
    %18 = math.rsqrt %17 : vector<16x1xf32>
    %19 = vector.broadcast %18 : vector<16x1xf32> to vector<16x32xf32>
    %20 = arith.mulf %15, %19 : vector<16x32xf32>
    %21 = vector.broadcast %1 : vector<1x32xf32> to vector<16x32xf32>
    %22 = arith.mulf %20, %21 : vector<16x32xf32>
    %23 = vector.broadcast %2 : vector<1x32xf32> to vector<16x32xf32>
    %24 = arith.addf %22, %23 : vector<16x32xf32>
    %c0_9 = arith.constant 0 : index
    %c0_10 = arith.constant 0 : index
    %c0_11 = arith.constant 0 : index
    %25 = vector.load %arg1[%c0_9, %c0_10, %c0_11] : memref<2x1x8xf32, #tpu.memory_space<vmem>>, vector<2x1x8xf32>
    %26 = arith.truncf %24 : vector<16x32xf32> to vector<16x32xbf16>
    %c0_12 = arith.constant 0 : index
    %c0_13 = arith.constant 0 : index
    %c0_14 = arith.constant 0 : index
    %27 = vector.load %arg4[%c0_12, %c0_13, %c0_14] : memref<2x32x96xbf16, #tpu.memory_space<vmem>>, vector<1x32x96xbf16>
    %28 = vector.shape_cast %27 : vector<1x32x96xbf16> to vector<32x96xbf16>
    %cst_15 = arith.constant dense<0.000000e+00> : vector<16x96xf32>
    %29 = tpu.matmul %26, %28, %cst_15 {dimension_numbers = #tpu.dot_dimension_numbers<[1], [0], [0], [1], [0, 0, 1, 1], [], []>} : vector<16x32xbf16>, vector<32x96xbf16>, vector<16x96xf32> -> vector<16x96xf32>
    %c0_16 = arith.constant 0 : index
    %c0_17 = arith.constant 0 : index
    %c0_18 = arith.constant 0 : index
    %30 = vector.load %arg5[%c0_16, %c0_17, %c0_18] : memref<2x1x96xf32, #tpu.memory_space<vmem>>, vector<1x1x96xf32>
    %31 = vector.shape_cast %30 : vector<1x1x96xf32> to vector<1x96xf32>
    %32 = vector.broadcast %31 : vector<1x96xf32> to vector<16x96xf32>
    %33 = arith.addf %29, %32 : vector<16x96xf32>
    %34 = vector.extract_strided_slice %33 {offsets = [0, 0], sizes = [16, 16], strides = [1, 1]} : vector<16x96xf32> to vector<16x16xf32>
    %35 = vector.shape_cast %34 : vector<16x16xf32> to vector<2x8x16xf32>
    %36 = arith.truncf %35 : vector<2x8x16xf32> to vector<2x8x16xbf16>
    %37 = vector.extract_strided_slice %33 {offsets = [0, 32], sizes = [16, 16], strides = [1, 1]} : vector<16x96xf32> to vector<16x16xf32>
    %38 = vector.shape_cast %37 : vector<16x16xf32> to vector<2x8x16xf32>
    %39 = arith.truncf %38 : vector<2x8x16xf32> to vector<2x8x16xbf16>
    %40 = vector.extract_strided_slice %33 {offsets = [0, 64], sizes = [16, 16], strides = [1, 1]} : vector<16x96xf32> to vector<16x16xf32>
    %41 = vector.shape_cast %40 : vector<16x16xf32> to vector<2x8x16xf32>
    %42 = arith.truncf %41 : vector<2x8x16xf32> to vector<2x8x16xbf16>
    "tpu.trace_start"() <{level = 10 : i32, message = "bqd,bkd->bqk"}> : () -> ()
    %cst_19 = arith.constant dense<0.000000e+00> : vector<2x8x8xf32>
    %43 = tpu.matmul %36, %39, %cst_19 {dimension_numbers = #tpu.dot_dimension_numbers<[2], [2], [1], [1], [0, 0, 0, 1, 1, 1], [0], [0]>} : vector<2x8x16xbf16>, vector<2x8x16xbf16>, vector<2x8x8xf32> -> vector<2x8x8xf32>
    "tpu.trace_stop"() : () -> ()
    %44 = vector.broadcast %25 : vector<2x1x8xf32> to vector<2x8x8xf32>
    %45 = arith.addf %43, %44 : vector<2x8x8xf32>
    %cst_20 = arith.constant dense<0xFF800000> : vector<2x8xf32>
    %46 = vector.multi_reduction <maximumf>, %45, %cst_20 [2] : vector<2x8x8xf32> to vector<2x8xf32>
    %47 = vector.shape_cast %46 : vector<2x8xf32> to vector<2x8x1xf32>
    %48 = vector.broadcast %47 : vector<2x8x1xf32> to vector<2x8x8xf32>
    %49 = arith.subf %45, %48 : vector<2x8x8xf32>
    %50 = math.exp %49 : vector<2x8x8xf32>
    %cst_21 = arith.constant dense<0.000000e+00> : vector<2x8xf32>
    %51 = vector.multi_reduction <add>, %50, %cst_21 [2] : vector<2x8x8xf32> to vector<2x8xf32>
    %52 = vector.shape_cast %51 : vector<2x8xf32> to vector<2x8x1xf32>
    %53 = tpu.reciprocal %52 {approx = true} : vector<2x8x1xf32> -> vector<2x8x1xf32>
    %54 = vector.broadcast %53 : vector<2x8x1xf32> to vector<2x8x8xf32>
    %55 = arith.mulf %50, %54 : vector<2x8x8xf32>
    %56 = arith.truncf %55 : vector<2x8x8xf32> to vector<2x8x8xbf16>
    "tpu.trace_start"() <{level = 10 : i32, message = "bqk,bkd->bqd"}> : () -> ()
    %cst_22 = arith.constant dense<0.000000e+00> : vector<2x8x16xf32>
    %57 = tpu.matmul %56, %42, %cst_22 {dimension_numbers = #tpu.dot_dimension_numbers<[2], [1], [1], [2], [0, 0, 0, 1, 1, 2], [0], [0]>} : vector<2x8x8xbf16>, vector<2x8x16xbf16>, vector<2x8x16xf32> -> vector<2x8x16xf32>
    "tpu.trace_stop"() : () -> ()
    %58 = vector.shape_cast %57 : vector<2x8x16xf32> to vector<16x16xf32>
    %59 = vector.extract_strided_slice %33 {offsets = [0, 16], sizes = [16, 16], strides = [1, 1]} : vector<16x96xf32> to vector<16x16xf32>
    %60 = vector.shape_cast %59 : vector<16x16xf32> to vector<2x8x16xf32>
    %61 = arith.truncf %60 : vector<2x8x16xf32> to vector<2x8x16xbf16>
    %62 = vector.extract_strided_slice %33 {offsets = [0, 48], sizes = [16, 16], strides = [1, 1]} : vector<16x96xf32> to vector<16x16xf32>
    %63 = vector.shape_cast %62 : vector<16x16xf32> to vector<2x8x16xf32>
    %64 = arith.truncf %63 : vector<2x8x16xf32> to vector<2x8x16xbf16>
    %65 = vector.extract_strided_slice %33 {offsets = [0, 80], sizes = [16, 16], strides = [1, 1]} : vector<16x96xf32> to vector<16x16xf32>
    %66 = vector.shape_cast %65 : vector<16x16xf32> to vector<2x8x16xf32>
    %67 = arith.truncf %66 : vector<2x8x16xf32> to vector<2x8x16xbf16>
    "tpu.trace_start"() <{level = 10 : i32, message = "bqd,bkd->bqk"}> : () -> ()
    %cst_23 = arith.constant dense<0.000000e+00> : vector<2x8x8xf32>
    %68 = tpu.matmul %61, %64, %cst_23 {dimension_numbers = #tpu.dot_dimension_numbers<[2], [2], [1], [1], [0, 0, 0, 1, 1, 1], [0], [0]>} : vector<2x8x16xbf16>, vector<2x8x16xbf16>, vector<2x8x8xf32> -> vector<2x8x8xf32>
    "tpu.trace_stop"() : () -> ()
    %69 = vector.broadcast %25 : vector<2x1x8xf32> to vector<2x8x8xf32>
    %70 = arith.addf %68, %69 : vector<2x8x8xf32>
    %cst_24 = arith.constant dense<0xFF800000> : vector<2x8xf32>
    %71 = vector.multi_reduction <maximumf>, %70, %cst_24 [2] : vector<2x8x8xf32> to vector<2x8xf32>
    %72 = vector.shape_cast %71 : vector<2x8xf32> to vector<2x8x1xf32>
    %73 = vector.broadcast %72 : vector<2x8x1xf32> to vector<2x8x8xf32>
    %74 = arith.subf %70, %73 : vector<2x8x8xf32>
    %75 = math.exp %74 : vector<2x8x8xf32>
    %cst_25 = arith.constant dense<0.000000e+00> : vector<2x8xf32>
    %76 = vector.multi_reduction <add>, %75, %cst_25 [2] : vector<2x8x8xf32> to vector<2x8xf32>
    %77 = vector.shape_cast %76 : vector<2x8xf32> to vector<2x8x1xf32>
    %78 = tpu.reciprocal %77 {approx = true} : vector<2x8x1xf32> -> vector<2x8x1xf32>
    %79 = vector.broadcast %78 : vector<2x8x1xf32> to vector<2x8x8xf32>
    %80 = arith.mulf %75, %79 : vector<2x8x8xf32>
    %81 = arith.truncf %80 : vector<2x8x8xf32> to vector<2x8x8xbf16>
    "tpu.trace_start"() <{level = 10 : i32, message = "bqk,bkd->bqd"}> : () -> ()
    %cst_26 = arith.constant dense<0.000000e+00> : vector<2x8x16xf32>
    %82 = tpu.matmul %81, %67, %cst_26 {dimension_numbers = #tpu.dot_dimension_numbers<[2], [1], [1], [2], [0, 0, 0, 1, 1, 2], [0], [0]>} : vector<2x8x8xbf16>, vector<2x8x16xbf16>, vector<2x8x16xf32> -> vector<2x8x16xf32>
    "tpu.trace_stop"() : () -> ()
    %83 = vector.shape_cast %82 : vector<2x8x16xf32> to vector<16x16xf32>
    %84 = tpu.concatenate %58, %83 in 1 : vector<16x16xf32>, vector<16x16xf32> -> vector<16x32xf32>
    %85 = arith.truncf %84 : vector<16x32xf32> to vector<16x32xbf16>
    %c0_27 = arith.constant 0 : index
    %c0_28 = arith.constant 0 : index
    %c0_29 = arith.constant 0 : index
    %86 = vector.load %arg6[%c0_27, %c0_28, %c0_29] : memref<2x32x32xbf16, #tpu.memory_space<vmem>>, vector<1x32x32xbf16>
    %87 = vector.shape_cast %86 : vector<1x32x32xbf16> to vector<32x32xbf16>
    %cst_30 = arith.constant dense<0.000000e+00> : vector<16x32xf32>
    %88 = tpu.matmul %85, %87, %cst_30 {dimension_numbers = #tpu.dot_dimension_numbers<[1], [0], [0], [1], [0, 0, 1, 1], [], []>} : vector<16x32xbf16>, vector<32x32xbf16>, vector<16x32xf32> -> vector<16x32xf32>
    %c0_31 = arith.constant 0 : index
    %c0_32 = arith.constant 0 : index
    %c0_33 = arith.constant 0 : index
    %89 = vector.load %arg7[%c0_31, %c0_32, %c0_33] : memref<2x1x32xf32, #tpu.memory_space<vmem>>, vector<1x1x32xf32>
    %90 = vector.shape_cast %89 : vector<1x1x32xf32> to vector<1x32xf32>
    %91 = vector.broadcast %90 : vector<1x32xf32> to vector<16x32xf32>
    %92 = arith.addf %88, %91 : vector<16x32xf32>
    %93 = arith.addf %24, %92 : vector<16x32xf32>
    %c0_34 = arith.constant 0 : index
    %c0_35 = arith.constant 0 : index
    %c0_36 = arith.constant 0 : index
    %94 = vector.load %arg8[%c0_34, %c0_35, %c0_36] : memref<2x1x32xf32, #tpu.memory_space<vmem>>, vector<1x1x32xf32>
    %95 = vector.shape_cast %94 : vector<1x1x32xf32> to vector<1x32xf32>
    %c0_37 = arith.constant 0 : index
    %c0_38 = arith.constant 0 : index
    %c0_39 = arith.constant 0 : index
    %96 = vector.load %arg9[%c0_37, %c0_38, %c0_39] : memref<2x1x32xf32, #tpu.memory_space<vmem>>, vector<1x1x32xf32>
    %97 = vector.shape_cast %96 : vector<1x1x32xf32> to vector<1x32xf32>
    %cst_40 = arith.constant dense<0.000000e+00> : vector<16xf32>
    %98 = vector.multi_reduction <add>, %93, %cst_40 [1] : vector<16x32xf32> to vector<16xf32>
    %99 = vector.shape_cast %98 : vector<16xf32> to vector<16x1xf32>
    %cst_41 = arith.constant 3.200000e+01 : f32
    %100 = vector.broadcast %cst_41 : f32 to vector<16x1xf32>
    %101 = arith.divf %99, %100 : vector<16x1xf32>
    %102 = vector.broadcast %101 : vector<16x1xf32> to vector<16x32xf32>
    %103 = arith.subf %93, %102 : vector<16x32xf32>
    %104 = arith.mulf %103, %103 : vector<16x32xf32>
    %cst_42 = arith.constant dense<0.000000e+00> : vector<16xf32>
    %105 = vector.multi_reduction <add>, %104, %cst_42 [1] : vector<16x32xf32> to vector<16xf32>
    %106 = vector.shape_cast %105 : vector<16xf32> to vector<16x1xf32>
    %cst_43 = arith.constant 3.200000e+01 : f32
    %107 = vector.broadcast %cst_43 : f32 to vector<16x1xf32>
    %108 = arith.divf %106, %107 : vector<16x1xf32>
    %109 = vector.broadcast %101 : vector<16x1xf32> to vector<16x32xf32>
    %110 = arith.subf %93, %109 : vector<16x32xf32>
    %cst_44 = arith.constant 9.99999996E-13 : f32
    %111 = vector.broadcast %cst_44 : f32 to vector<16x1xf32>
    %112 = arith.addf %108, %111 : vector<16x1xf32>
    %113 = math.rsqrt %112 : vector<16x1xf32>
    %114 = vector.broadcast %113 : vector<16x1xf32> to vector<16x32xf32>
    %115 = arith.mulf %110, %114 : vector<16x32xf32>
    %116 = vector.broadcast %95 : vector<1x32xf32> to vector<16x32xf32>
    %117 = arith.mulf %115, %116 : vector<16x32xf32>
    %118 = vector.broadcast %97 : vector<1x32xf32> to vector<16x32xf32>
    %119 = arith.addf %117, %118 : vector<16x32xf32>
    %120 = arith.truncf %119 : vector<16x32xf32> to vector<16x32xbf16>
    %c0_45 = arith.constant 0 : index
    %c0_46 = arith.constant 0 : index
    %c0_47 = arith.constant 0 : index
    %121 = vector.load %arg10[%c0_45, %c0_46, %c0_47] : memref<2x32x64xbf16, #tpu.memory_space<vmem>>, vector<1x32x64xbf16>
    %122 = vector.shape_cast %121 : vector<1x32x64xbf16> to vector<32x64xbf16>
    %cst_48 = arith.constant dense<0.000000e+00> : vector<16x64xf32>
    %123 = tpu.matmul %120, %122, %cst_48 {dimension_numbers = #tpu.dot_dimension_numbers<[1], [0], [0], [1], [0, 0, 1, 1], [], []>} : vector<16x32xbf16>, vector<32x64xbf16>, vector<16x64xf32> -> vector<16x64xf32>
    %c0_49 = arith.constant 0 : index
    %c0_50 = arith.constant 0 : index
    %c0_51 = arith.constant 0 : index
    %124 = vector.load %arg11[%c0_49, %c0_50, %c0_51] : memref<2x1x64xf32, #tpu.memory_space<vmem>>, vector<1x1x64xf32>
    %125 = vector.shape_cast %124 : vector<1x1x64xf32> to vector<1x64xf32>
    %126 = vector.broadcast %125 : vector<1x64xf32> to vector<16x64xf32>
    %127 = arith.addf %123, %126 : vector<16x64xf32>
    %128 = arith.mulf %127, %127 : vector<16x64xf32>
    %129 = arith.mulf %127, %128 : vector<16x64xf32>
    %cst_52 = arith.constant 4.471500e-02 : f32
    %130 = vector.broadcast %cst_52 : f32 to vector<16x64xf32>
    %131 = arith.mulf %130, %129 : vector<16x64xf32>
    %132 = arith.addf %127, %131 : vector<16x64xf32>
    %cst_53 = arith.constant 0.797884583 : f32
    %133 = vector.broadcast %cst_53 : f32 to vector<16x64xf32>
    %134 = arith.mulf %133, %132 : vector<16x64xf32>
    %135 = math.tanh %134 : vector<16x64xf32>
    %cst_54 = arith.constant 1.000000e+00 : f32
    %136 = vector.broadcast %cst_54 : f32 to vector<16x64xf32>
    %137 = arith.addf %136, %135 : vector<16x64xf32>
    %cst_55 = arith.constant 5.000000e-01 : f32
    %138 = vector.broadcast %cst_55 : f32 to vector<16x64xf32>
    %139 = arith.mulf %138, %137 : vector<16x64xf32>
    %140 = arith.mulf %127, %139 : vector<16x64xf32>
    %141 = arith.truncf %140 : vector<16x64xf32> to vector<16x64xbf16>
    %c0_56 = arith.constant 0 : index
    %c0_57 = arith.constant 0 : index
    %c0_58 = arith.constant 0 : index
    %142 = vector.load %arg12[%c0_56, %c0_57, %c0_58] : memref<2x64x32xbf16, #tpu.memory_space<vmem>>, vector<1x64x32xbf16>
    %143 = vector.shape_cast %142 : vector<1x64x32xbf16> to vector<64x32xbf16>
    %cst_59 = arith.constant dense<0.000000e+00> : vector<16x32xf32>
    %144 = tpu.matmul %141, %143, %cst_59 {dimension_numbers = #tpu.dot_dimension_numbers<[1], [0], [0], [1], [0, 0, 1, 1], [], []>} : vector<16x64xbf16>, vector<64x32xbf16>, vector<16x32xf32> -> vector<16x32xf32>
    %c0_60 = arith.constant 0 : index
    %c0_61 = arith.constant 0 : index
    %c0_62 = arith.constant 0 : index
    %145 = vector.load %arg13[%c0_60, %c0_61, %c0_62] : memref<2x1x32xf32, #tpu.memory_space<vmem>>, vector<1x1x32xf32>
    %146 = vector.shape_cast %145 : vector<1x1x32xf32> to vector<1x32xf32>
    %147 = vector.broadcast %146 : vector<1x32xf32> to vector<16x32xf32>
    %148 = arith.addf %144, %147 : vector<16x32xf32>
    %149 = arith.addf %119, %148 : vector<16x32xf32>
    %c0_63 = arith.constant 0 : index
    %c0_64 = arith.constant 0 : index
    %c0_65 = arith.constant 0 : index
    %150 = vector.load %arg14[%c0_63, %c0_64, %c0_65] : memref<2x1x32xf32, #tpu.memory_space<vmem>>, vector<1x1x32xf32>
    %151 = vector.shape_cast %150 : vector<1x1x32xf32> to vector<1x32xf32>
    %c0_66 = arith.constant 0 : index
    %c0_67 = arith.constant 0 : index
    %c0_68 = arith.constant 0 : index
    %152 = vector.load %arg15[%c0_66, %c0_67, %c0_68] : memref<2x1x32xf32, #tpu.memory_space<vmem>>, vector<1x1x32xf32>
    %153 = vector.shape_cast %152 : vector<1x1x32xf32> to vector<1x32xf32>
    %cst_69 = arith.constant dense<0.000000e+00> : vector<16xf32>
    %154 = vector.multi_reduction <add>, %149, %cst_69 [1] : vector<16x32xf32> to vector<16xf32>
    %155 = vector.shape_cast %154 : vector<16xf32> to vector<16x1xf32>
    %cst_70 = arith.constant 3.200000e+01 : f32
    %156 = vector.broadcast %cst_70 : f32 to vector<16x1xf32>
    %157 = arith.divf %155, %156 : vector<16x1xf32>
    %158 = vector.broadcast %157 : vector<16x1xf32> to vector<16x32xf32>
    %159 = arith.subf %149, %158 : vector<16x32xf32>
    %160 = arith.mulf %159, %159 : vector<16x32xf32>
    %cst_71 = arith.constant dense<0.000000e+00> : vector<16xf32>
    %161 = vector.multi_reduction <add>, %160, %cst_71 [1] : vector<16x32xf32> to vector<16xf32>
    %162 = vector.shape_cast %161 : vector<16xf32> to vector<16x1xf32>
    %cst_72 = arith.constant 3.200000e+01 : f32
    %163 = vector.broadcast %cst_72 : f32 to vector<16x1xf32>
    %164 = arith.divf %162, %163 : vector<16x1xf32>
    %165 = vector.broadcast %157 : vector<16x1xf32> to vector<16x32xf32>
    %166 = arith.subf %149, %165 : vector<16x32xf32>
    %cst_73 = arith.constant 9.99999996E-13 : f32
    %167 = vector.broadcast %cst_73 : f32 to vector<16x1xf32>
    %168 = arith.addf %164, %167 : vector<16x1xf32>
    %169 = math.rsqrt %168 : vector<16x1xf32>
    %170 = vector.broadcast %169 : vector<16x1xf32> to vector<16x32xf32>
    %171 = arith.mulf %166, %170 : vector<16x32xf32>
    %172 = vector.broadcast %151 : vector<1x32xf32> to vector<16x32xf32>
    %173 = arith.mulf %171, %172 : vector<16x32xf32>
    %174 = vector.broadcast %153 : vector<1x32xf32> to vector<16x32xf32>
    %175 = arith.addf %173, %174 : vector<16x32xf32>
    %176 = arith.truncf %175 : vector<16x32xf32> to vector<16x32xbf16>
    %c1 = arith.constant 1 : index
    %c0_74 = arith.constant 0 : index
    %c0_75 = arith.constant 0 : index
    %177 = vector.load %arg4[%c1, %c0_74, %c0_75] : memref<2x32x96xbf16, #tpu.memory_space<vmem>>, vector<1x32x96xbf16>
    %178 = vector.shape_cast %177 : vector<1x32x96xbf16> to vector<32x96xbf16>
    %cst_76 = arith.constant dense<0.000000e+00> : vector<16x96xf32>
    %179 = tpu.matmul %176, %178, %cst_76 {dimension_numbers = #tpu.dot_dimension_numbers<[1], [0], [0], [1], [0, 0, 1, 1], [], []>} : vector<16x32xbf16>, vector<32x96xbf16>, vector<16x96xf32> -> vector<16x96xf32>
    %c1_77 = arith.constant 1 : index
    %c0_78 = arith.constant 0 : index
    %c0_79 = arith.constant 0 : index
    %180 = vector.load %arg5[%c1_77, %c0_78, %c0_79] : memref<2x1x96xf32, #tpu.memory_space<vmem>>, vector<1x1x96xf32>
    %181 = vector.shape_cast %180 : vector<1x1x96xf32> to vector<1x96xf32>
    %182 = vector.broadcast %181 : vector<1x96xf32> to vector<16x96xf32>
    %183 = arith.addf %179, %182 : vector<16x96xf32>
    %184 = vector.extract_strided_slice %183 {offsets = [0, 0], sizes = [16, 16], strides = [1, 1]} : vector<16x96xf32> to vector<16x16xf32>
    %185 = vector.shape_cast %184 : vector<16x16xf32> to vector<2x8x16xf32>
    %186 = arith.truncf %185 : vector<2x8x16xf32> to vector<2x8x16xbf16>
    %187 = vector.extract_strided_slice %183 {offsets = [0, 32], sizes = [16, 16], strides = [1, 1]} : vector<16x96xf32> to vector<16x16xf32>
    %188 = vector.shape_cast %187 : vector<16x16xf32> to vector<2x8x16xf32>
    %189 = arith.truncf %188 : vector<2x8x16xf32> to vector<2x8x16xbf16>
    %190 = vector.extract_strided_slice %183 {offsets = [0, 64], sizes = [16, 16], strides = [1, 1]} : vector<16x96xf32> to vector<16x16xf32>
    %191 = vector.shape_cast %190 : vector<16x16xf32> to vector<2x8x16xf32>
    %192 = arith.truncf %191 : vector<2x8x16xf32> to vector<2x8x16xbf16>
    "tpu.trace_start"() <{level = 10 : i32, message = "bqd,bkd->bqk"}> : () -> ()
    %cst_80 = arith.constant dense<0.000000e+00> : vector<2x8x8xf32>
    %193 = tpu.matmul %186, %189, %cst_80 {dimension_numbers = #tpu.dot_dimension_numbers<[2], [2], [1], [1], [0, 0, 0, 1, 1, 1], [0], [0]>} : vector<2x8x16xbf16>, vector<2x8x16xbf16>, vector<2x8x8xf32> -> vector<2x8x8xf32>
    "tpu.trace_stop"() : () -> ()
    %194 = vector.broadcast %25 : vector<2x1x8xf32> to vector<2x8x8xf32>
    %195 = arith.addf %193, %194 : vector<2x8x8xf32>
    %cst_81 = arith.constant dense<0xFF800000> : vector<2x8xf32>
    %196 = vector.multi_reduction <maximumf>, %195, %cst_81 [2] : vector<2x8x8xf32> to vector<2x8xf32>
    %197 = vector.shape_cast %196 : vector<2x8xf32> to vector<2x8x1xf32>
    %198 = vector.broadcast %197 : vector<2x8x1xf32> to vector<2x8x8xf32>
    %199 = arith.subf %195, %198 : vector<2x8x8xf32>
    %200 = math.exp %199 : vector<2x8x8xf32>
    %cst_82 = arith.constant dense<0.000000e+00> : vector<2x8xf32>
    %201 = vector.multi_reduction <add>, %200, %cst_82 [2] : vector<2x8x8xf32> to vector<2x8xf32>
    %202 = vector.shape_cast %201 : vector<2x8xf32> to vector<2x8x1xf32>
    %203 = tpu.reciprocal %202 {approx = true} : vector<2x8x1xf32> -> vector<2x8x1xf32>
    %204 = vector.broadcast %203 : vector<2x8x1xf32> to vector<2x8x8xf32>
    %205 = arith.mulf %200, %204 : vector<2x8x8xf32>
    %206 = arith.truncf %205 : vector<2x8x8xf32> to vector<2x8x8xbf16>
    "tpu.trace_start"() <{level = 10 : i32, message = "bqk,bkd->bqd"}> : () -> ()
    %cst_83 = arith.constant dense<0.000000e+00> : vector<2x8x16xf32>
    %207 = tpu.matmul %206, %192, %cst_83 {dimension_numbers = #tpu.dot_dimension_numbers<[2], [1], [1], [2], [0, 0, 0, 1, 1, 2], [0], [0]>} : vector<2x8x8xbf16>, vector<2x8x16xbf16>, vector<2x8x16xf32> -> vector<2x8x16xf32>
    "tpu.trace_stop"() : () -> ()
    %208 = vector.shape_cast %207 : vector<2x8x16xf32> to vector<16x16xf32>
    %209 = vector.extract_strided_slice %183 {offsets = [0, 16], sizes = [16, 16], strides = [1, 1]} : vector<16x96xf32> to vector<16x16xf32>
    %210 = vector.shape_cast %209 : vector<16x16xf32> to vector<2x8x16xf32>
    %211 = arith.truncf %210 : vector<2x8x16xf32> to vector<2x8x16xbf16>
    %212 = vector.extract_strided_slice %183 {offsets = [0, 48], sizes = [16, 16], strides = [1, 1]} : vector<16x96xf32> to vector<16x16xf32>
    %213 = vector.shape_cast %212 : vector<16x16xf32> to vector<2x8x16xf32>
    %214 = arith.truncf %213 : vector<2x8x16xf32> to vector<2x8x16xbf16>
    %215 = vector.extract_strided_slice %183 {offsets = [0, 80], sizes = [16, 16], strides = [1, 1]} : vector<16x96xf32> to vector<16x16xf32>
    %216 = vector.shape_cast %215 : vector<16x16xf32> to vector<2x8x16xf32>
    %217 = arith.truncf %216 : vector<2x8x16xf32> to vector<2x8x16xbf16>
    "tpu.trace_start"() <{level = 10 : i32, message = "bqd,bkd->bqk"}> : () -> ()
    %cst_84 = arith.constant dense<0.000000e+00> : vector<2x8x8xf32>
    %218 = tpu.matmul %211, %214, %cst_84 {dimension_numbers = #tpu.dot_dimension_numbers<[2], [2], [1], [1], [0, 0, 0, 1, 1, 1], [0], [0]>} : vector<2x8x16xbf16>, vector<2x8x16xbf16>, vector<2x8x8xf32> -> vector<2x8x8xf32>
    "tpu.trace_stop"() : () -> ()
    %219 = vector.broadcast %25 : vector<2x1x8xf32> to vector<2x8x8xf32>
    %220 = arith.addf %218, %219 : vector<2x8x8xf32>
    %cst_85 = arith.constant dense<0xFF800000> : vector<2x8xf32>
    %221 = vector.multi_reduction <maximumf>, %220, %cst_85 [2] : vector<2x8x8xf32> to vector<2x8xf32>
    %222 = vector.shape_cast %221 : vector<2x8xf32> to vector<2x8x1xf32>
    %223 = vector.broadcast %222 : vector<2x8x1xf32> to vector<2x8x8xf32>
    %224 = arith.subf %220, %223 : vector<2x8x8xf32>
    %225 = math.exp %224 : vector<2x8x8xf32>
    %cst_86 = arith.constant dense<0.000000e+00> : vector<2x8xf32>
    %226 = vector.multi_reduction <add>, %225, %cst_86 [2] : vector<2x8x8xf32> to vector<2x8xf32>
    %227 = vector.shape_cast %226 : vector<2x8xf32> to vector<2x8x1xf32>
    %228 = tpu.reciprocal %227 {approx = true} : vector<2x8x1xf32> -> vector<2x8x1xf32>
    %229 = vector.broadcast %228 : vector<2x8x1xf32> to vector<2x8x8xf32>
    %230 = arith.mulf %225, %229 : vector<2x8x8xf32>
    %231 = arith.truncf %230 : vector<2x8x8xf32> to vector<2x8x8xbf16>
    "tpu.trace_start"() <{level = 10 : i32, message = "bqk,bkd->bqd"}> : () -> ()
    %cst_87 = arith.constant dense<0.000000e+00> : vector<2x8x16xf32>
    %232 = tpu.matmul %231, %217, %cst_87 {dimension_numbers = #tpu.dot_dimension_numbers<[2], [1], [1], [2], [0, 0, 0, 1, 1, 2], [0], [0]>} : vector<2x8x8xbf16>, vector<2x8x16xbf16>, vector<2x8x16xf32> -> vector<2x8x16xf32>
    "tpu.trace_stop"() : () -> ()
    %233 = vector.shape_cast %232 : vector<2x8x16xf32> to vector<16x16xf32>
    %234 = tpu.concatenate %208, %233 in 1 : vector<16x16xf32>, vector<16x16xf32> -> vector<16x32xf32>
    %235 = arith.truncf %234 : vector<16x32xf32> to vector<16x32xbf16>
    %c1_88 = arith.constant 1 : index
    %c0_89 = arith.constant 0 : index
    %c0_90 = arith.constant 0 : index
    %236 = vector.load %arg6[%c1_88, %c0_89, %c0_90] : memref<2x32x32xbf16, #tpu.memory_space<vmem>>, vector<1x32x32xbf16>
    %237 = vector.shape_cast %236 : vector<1x32x32xbf16> to vector<32x32xbf16>
    %cst_91 = arith.constant dense<0.000000e+00> : vector<16x32xf32>
    %238 = tpu.matmul %235, %237, %cst_91 {dimension_numbers = #tpu.dot_dimension_numbers<[1], [0], [0], [1], [0, 0, 1, 1], [], []>} : vector<16x32xbf16>, vector<32x32xbf16>, vector<16x32xf32> -> vector<16x32xf32>
    %c1_92 = arith.constant 1 : index
    %c0_93 = arith.constant 0 : index
    %c0_94 = arith.constant 0 : index
    %239 = vector.load %arg7[%c1_92, %c0_93, %c0_94] : memref<2x1x32xf32, #tpu.memory_space<vmem>>, vector<1x1x32xf32>
    %240 = vector.shape_cast %239 : vector<1x1x32xf32> to vector<1x32xf32>
    %241 = vector.broadcast %240 : vector<1x32xf32> to vector<16x32xf32>
    %242 = arith.addf %238, %241 : vector<16x32xf32>
    %243 = arith.addf %175, %242 : vector<16x32xf32>
    %c1_95 = arith.constant 1 : index
    %c0_96 = arith.constant 0 : index
    %c0_97 = arith.constant 0 : index
    %244 = vector.load %arg8[%c1_95, %c0_96, %c0_97] : memref<2x1x32xf32, #tpu.memory_space<vmem>>, vector<1x1x32xf32>
    %245 = vector.shape_cast %244 : vector<1x1x32xf32> to vector<1x32xf32>
    %c1_98 = arith.constant 1 : index
    %c0_99 = arith.constant 0 : index
    %c0_100 = arith.constant 0 : index
    %246 = vector.load %arg9[%c1_98, %c0_99, %c0_100] : memref<2x1x32xf32, #tpu.memory_space<vmem>>, vector<1x1x32xf32>
    %247 = vector.shape_cast %246 : vector<1x1x32xf32> to vector<1x32xf32>
    %cst_101 = arith.constant dense<0.000000e+00> : vector<16xf32>
    %248 = vector.multi_reduction <add>, %243, %cst_101 [1] : vector<16x32xf32> to vector<16xf32>
    %249 = vector.shape_cast %248 : vector<16xf32> to vector<16x1xf32>
    %cst_102 = arith.constant 3.200000e+01 : f32
    %250 = vector.broadcast %cst_102 : f32 to vector<16x1xf32>
    %251 = arith.divf %249, %250 : vector<16x1xf32>
    %252 = vector.broadcast %251 : vector<16x1xf32> to vector<16x32xf32>
    %253 = arith.subf %243, %252 : vector<16x32xf32>
    %254 = arith.mulf %253, %253 : vector<16x32xf32>
    %cst_103 = arith.constant dense<0.000000e+00> : vector<16xf32>
    %255 = vector.multi_reduction <add>, %254, %cst_103 [1] : vector<16x32xf32> to vector<16xf32>
    %256 = vector.shape_cast %255 : vector<16xf32> to vector<16x1xf32>
    %cst_104 = arith.constant 3.200000e+01 : f32
    %257 = vector.broadcast %cst_104 : f32 to vector<16x1xf32>
    %258 = arith.divf %256, %257 : vector<16x1xf32>
    %259 = vector.broadcast %251 : vector<16x1xf32> to vector<16x32xf32>
    %260 = arith.subf %243, %259 : vector<16x32xf32>
    %cst_105 = arith.constant 9.99999996E-13 : f32
    %261 = vector.broadcast %cst_105 : f32 to vector<16x1xf32>
    %262 = arith.addf %258, %261 : vector<16x1xf32>
    %263 = math.rsqrt %262 : vector<16x1xf32>
    %264 = vector.broadcast %263 : vector<16x1xf32> to vector<16x32xf32>
    %265 = arith.mulf %260, %264 : vector<16x32xf32>
    %266 = vector.broadcast %245 : vector<1x32xf32> to vector<16x32xf32>
    %267 = arith.mulf %265, %266 : vector<16x32xf32>
    %268 = vector.broadcast %247 : vector<1x32xf32> to vector<16x32xf32>
    %269 = arith.addf %267, %268 : vector<16x32xf32>
    %270 = arith.truncf %269 : vector<16x32xf32> to vector<16x32xbf16>
    %c1_106 = arith.constant 1 : index
    %c0_107 = arith.constant 0 : index
    %c0_108 = arith.constant 0 : index
    %271 = vector.load %arg10[%c1_106, %c0_107, %c0_108] : memref<2x32x64xbf16, #tpu.memory_space<vmem>>, vector<1x32x64xbf16>
    %272 = vector.shape_cast %271 : vector<1x32x64xbf16> to vector<32x64xbf16>
    %cst_109 = arith.constant dense<0.000000e+00> : vector<16x64xf32>
    %273 = tpu.matmul %270, %272, %cst_109 {dimension_numbers = #tpu.dot_dimension_numbers<[1], [0], [0], [1], [0, 0, 1, 1], [], []>} : vector<16x32xbf16>, vector<32x64xbf16>, vector<16x64xf32> -> vector<16x64xf32>
    %c1_110 = arith.constant 1 : index
    %c0_111 = arith.constant 0 : index
    %c0_112 = arith.constant 0 : index
    %274 = vector.load %arg11[%c1_110, %c0_111, %c0_112] : memref<2x1x64xf32, #tpu.memory_space<vmem>>, vector<1x1x64xf32>
    %275 = vector.shape_cast %274 : vector<1x1x64xf32> to vector<1x64xf32>
    %276 = vector.broadcast %275 : vector<1x64xf32> to vector<16x64xf32>
    %277 = arith.addf %273, %276 : vector<16x64xf32>
    %278 = arith.mulf %277, %277 : vector<16x64xf32>
    %279 = arith.mulf %277, %278 : vector<16x64xf32>
    %cst_113 = arith.constant 4.471500e-02 : f32
    %280 = vector.broadcast %cst_113 : f32 to vector<16x64xf32>
    %281 = arith.mulf %280, %279 : vector<16x64xf32>
    %282 = arith.addf %277, %281 : vector<16x64xf32>
    %cst_114 = arith.constant 0.797884583 : f32
    %283 = vector.broadcast %cst_114 : f32 to vector<16x64xf32>
    %284 = arith.mulf %283, %282 : vector<16x64xf32>
    %285 = math.tanh %284 : vector<16x64xf32>
    %cst_115 = arith.constant 1.000000e+00 : f32
    %286 = vector.broadcast %cst_115 : f32 to vector<16x64xf32>
    %287 = arith.addf %286, %285 : vector<16x64xf32>
    %cst_116 = arith.constant 5.000000e-01 : f32
    %288 = vector.broadcast %cst_116 : f32 to vector<16x64xf32>
    %289 = arith.mulf %288, %287 : vector<16x64xf32>
    %290 = arith.mulf %277, %289 : vector<16x64xf32>
    %291 = arith.truncf %290 : vector<16x64xf32> to vector<16x64xbf16>
    %c1_117 = arith.constant 1 : index
    %c0_118 = arith.constant 0 : index
    %c0_119 = arith.constant 0 : index
    %292 = vector.load %arg12[%c1_117, %c0_118, %c0_119] : memref<2x64x32xbf16, #tpu.memory_space<vmem>>, vector<1x64x32xbf16>
    %293 = vector.shape_cast %292 : vector<1x64x32xbf16> to vector<64x32xbf16>
    %cst_120 = arith.constant dense<0.000000e+00> : vector<16x32xf32>
    %294 = tpu.matmul %291, %293, %cst_120 {dimension_numbers = #tpu.dot_dimension_numbers<[1], [0], [0], [1], [0, 0, 1, 1], [], []>} : vector<16x64xbf16>, vector<64x32xbf16>, vector<16x32xf32> -> vector<16x32xf32>
    %c1_121 = arith.constant 1 : index
    %c0_122 = arith.constant 0 : index
    %c0_123 = arith.constant 0 : index
    %295 = vector.load %arg13[%c1_121, %c0_122, %c0_123] : memref<2x1x32xf32, #tpu.memory_space<vmem>>, vector<1x1x32xf32>
    %296 = vector.shape_cast %295 : vector<1x1x32xf32> to vector<1x32xf32>
    %297 = vector.broadcast %296 : vector<1x32xf32> to vector<16x32xf32>
    %298 = arith.addf %294, %297 : vector<16x32xf32>
    %299 = arith.addf %269, %298 : vector<16x32xf32>
    %c1_124 = arith.constant 1 : index
    %c0_125 = arith.constant 0 : index
    %c0_126 = arith.constant 0 : index
    %300 = vector.load %arg14[%c1_124, %c0_125, %c0_126] : memref<2x1x32xf32, #tpu.memory_space<vmem>>, vector<1x1x32xf32>
    %301 = vector.shape_cast %300 : vector<1x1x32xf32> to vector<1x32xf32>
    %c1_127 = arith.constant 1 : index
    %c0_128 = arith.constant 0 : index
    %c0_129 = arith.constant 0 : index
    %302 = vector.load %arg15[%c1_127, %c0_128, %c0_129] : memref<2x1x32xf32, #tpu.memory_space<vmem>>, vector<1x1x32xf32>
    %303 = vector.shape_cast %302 : vector<1x1x32xf32> to vector<1x32xf32>
    %cst_130 = arith.constant dense<0.000000e+00> : vector<16xf32>
    %304 = vector.multi_reduction <add>, %299, %cst_130 [1] : vector<16x32xf32> to vector<16xf32>
    %305 = vector.shape_cast %304 : vector<16xf32> to vector<16x1xf32>
    %cst_131 = arith.constant 3.200000e+01 : f32
    %306 = vector.broadcast %cst_131 : f32 to vector<16x1xf32>
    %307 = arith.divf %305, %306 : vector<16x1xf32>
    %308 = vector.broadcast %307 : vector<16x1xf32> to vector<16x32xf32>
    %309 = arith.subf %299, %308 : vector<16x32xf32>
    %310 = arith.mulf %309, %309 : vector<16x32xf32>
    %cst_132 = arith.constant dense<0.000000e+00> : vector<16xf32>
    %311 = vector.multi_reduction <add>, %310, %cst_132 [1] : vector<16x32xf32> to vector<16xf32>
    %312 = vector.shape_cast %311 : vector<16xf32> to vector<16x1xf32>
    %cst_133 = arith.constant 3.200000e+01 : f32
    %313 = vector.broadcast %cst_133 : f32 to vector<16x1xf32>
    %314 = arith.divf %312, %313 : vector<16x1xf32>
    %315 = vector.broadcast %307 : vector<16x1xf32> to vector<16x32xf32>
    %316 = arith.subf %299, %315 : vector<16x32xf32>
    %cst_134 = arith.constant 9.99999996E-13 : f32
    %317 = vector.broadcast %cst_134 : f32 to vector<16x1xf32>
    %318 = arith.addf %314, %317 : vector<16x1xf32>
    %319 = math.rsqrt %318 : vector<16x1xf32>
    %320 = vector.broadcast %319 : vector<16x1xf32> to vector<16x32xf32>
    %321 = arith.mulf %316, %320 : vector<16x32xf32>
    %322 = vector.broadcast %301 : vector<1x32xf32> to vector<16x32xf32>
    %323 = arith.mulf %321, %322 : vector<16x32xf32>
    %324 = vector.broadcast %303 : vector<1x32xf32> to vector<16x32xf32>
    %325 = arith.addf %323, %324 : vector<16x32xf32>
    %326 = arith.truncf %325 : vector<16x32xf32> to vector<16x32xbf16>
    %c0_135 = arith.constant 0 : index
    %c0_136 = arith.constant 0 : index
    %327 = vector.load %arg16[%c0_135, %c0_136] : memref<32x128xbf16, #tpu.memory_space<vmem>>, vector<32x128xbf16>
    %cst_137 = arith.constant dense<0.000000e+00> : vector<16x128xf32>
    %328 = tpu.matmul %326, %327, %cst_137 {dimension_numbers = #tpu.dot_dimension_numbers<[1], [0], [0], [1], [0, 0, 1, 1], [], []>} : vector<16x32xbf16>, vector<32x128xbf16>, vector<16x128xf32> -> vector<16x128xf32>
    %c0_138 = arith.constant 0 : index
    %c0_139 = arith.constant 0 : index
    %329 = vector.load %arg17[%c0_138, %c0_139] : memref<1x128xf32, #tpu.memory_space<vmem>>, vector<1x128xf32>
    %330 = vector.broadcast %329 : vector<1x128xf32> to vector<16x128xf32>
    %331 = arith.addf %328, %330 : vector<16x128xf32>
    %c0_140 = arith.constant 0 : index
    %c0_141 = arith.constant 0 : index
    %332 = vector.load %arg18[%c0_140, %c0_141] : memref<16x128xf32, #tpu.memory_space<vmem>>, vector<16x128xf32>
    tpu.vector_store %arg18[%c0_140, %c0_141], %331 {strides = array<i32>} : memref<16x128xf32, #tpu.memory_space<vmem>>, vector<16x128xf32>,
    return
  }
}

</mosaic_0001>

<llo_original>
// kernel: bert_ner_forward.1
$region0: #{bert_ner_forward.1}
  #allocation0 [shape = 'u32[]', space=smem, size = 0x4, offset = 0x4, fixed_abs, tag = 'smem constant byte address 0x4 - core index']
  #allocation1 [shape = 'u32[144,128]{1,0:T(1,128)}', space=vmem, size = 0x12000, scoped, tag = 'internal scratch']
  %s0 = inlined_call_operand.vmem [shape: f32[16,32], index: 0, kind: input, shape index: {}]
  %s1 = inlined_call_operand.vmem [shape: f32[2,1,8], index: 1, kind: input, shape index: {}]
  %s2 = inlined_call_operand.vmem [shape: f32[1,32], index: 2, kind: input, shape index: {}]
  %s3 = inlined_call_operand.vmem [shape: f32[1,32], index: 3, kind: input, shape index: {}]
  %s4 = inlined_call_operand.vmem [shape: bf16[2,32,96], index: 4, kind: input, shape index: {}]
  %s5 = inlined_call_operand.vmem [shape: f32[2,1,96], index: 5, kind: input, shape index: {}]
  %s6 = inlined_call_operand.vmem [shape: bf16[2,32,32], index: 6, kind: input, shape index: {}]
  %s7 = inlined_call_operand.vmem [shape: f32[2,1,32], index: 7, kind: input, shape index: {}]
  %s8 = inlined_call_operand.vmem [shape: f32[2,1,32], index: 8, kind: input, shape index: {}]
  %s9 = inlined_call_operand.vmem [shape: f32[2,1,32], index: 9, kind: input, shape index: {}]
  %s10 = inlined_call_operand.vmem [shape: bf16[2,32,64], index: 10, kind: input, shape index: {}]
  %s11 = inlined_call_operand.vmem [shape: f32[2,1,64], index: 11, kind: input, shape index: {}]
  %s12 = inlined_call_operand.vmem [shape: bf16[2,64,32], index: 12, kind: input, shape index: {}]
  %s13 = inlined_call_operand.vmem [shape: f32[2,1,32], index: 13, kind: input, shape index: {}]
  %s14 = inlined_call_operand.vmem [shape: f32[2,1,32], index: 14, kind: input, shape index: {}]
  %s15 = inlined_call_operand.vmem [shape: f32[2,1,32], index: 15, kind: input, shape index: {}]
  %s16 = inlined_call_operand.vmem [shape: bf16[32,128], index: 16, kind: input, shape index: {}]
  %s17 = inlined_call_operand.vmem [shape: f32[1,128], index: 17, kind: input, shape index: {}]
  %s18 = inlined_call_operand.vmem [shape: f32[16,128], index: 18, kind: output, shape index: {}]
  %s19 = sld [smem:[#allocation0]]
  $region82: #{bert_ner_forward.1} parent=0
    _
  %s21 = ssub.s32 1, %s19
  %s22 = scalar_select 0, %s21, %s19
  // Predicated region
  $region2: #{bert_ner_forward.1} parent=0 // pred_check
    _
  $region3: #{bert_ner_forward.1} parent=0 // pred_check_branch
    %24 = sbr.rel (0) target = $region5
  $region4: #{bert_ner_forward.1} parent=0 // pred_region
    _
  $region5: #{bert_ner_forward.1} parent=0 // pred_fallthru
    _
  // Predicated region
  $region6: #{bert_ner_forward.1} parent=0 // pred_check
    _
  $region7: #{bert_ner_forward.1} parent=0 // pred_check_branch
    %26 = sbr.rel (0) target = $region9
  $region8: #{bert_ner_forward.1} parent=0 // pred_region
    _
  $region9: #{bert_ner_forward.1} parent=0 // pred_fallthru
    _
  // Predicated region
  $region10: #{bert_ner_forward.1} parent=0 // pred_check
    _
  $region11: #{bert_ner_forward.1} parent=0 // pred_check_branch
    %28 = sbr.rel (0) target = $region13
  $region12: #{bert_ner_forward.1} parent=0 // pred_region
    _
  $region13: #{bert_ner_forward.1} parent=0 // pred_fallthru
    _
  // Predicated region
  $region14: #{bert_ner_forward.1} parent=0 // pred_check
    _
  $region15: #{bert_ner_forward.1} parent=0 // pred_check_branch
    %30 = sbr.rel (0) target = $region17
  $region16: #{bert_ner_forward.1} parent=0 // pred_region
    _
  $region17: #{bert_ner_forward.1} parent=0 // pred_fallthru
    _
  // Predicated region
  $region18: #{bert_ner_forward.1} parent=0 // pred_check
    _
  $region19: #{bert_ner_forward.1} parent=0 // pred_check_branch
    %32 = sbr.rel (0) target = $region21
  $region20: #{bert_ner_forward.1} parent=0 // pred_region
    _
  $region21: #{bert_ner_forward.1} parent=0 // pred_fallthru
    _
  // Predicated region
  $region22: #{bert_ner_forward.1} parent=0 // pred_check
    _
  $region23: #{bert_ner_forward.1} parent=0 // pred_check_branch
    %34 = sbr.rel (0) target = $region25
  $region24: #{bert_ner_forward.1} parent=0 // pred_region
    _
  $region25: #{bert_ner_forward.1} parent=0 // pred_fallthru
    _
  // Predicated region
  $region26: #{bert_ner_forward.1} parent=0 // pred_check
    _
  $region27: #{bert_ner_forward.1} parent=0 // pred_check_branch
    %36 = sbr.rel (0) target = $region29
  $region28: #{bert_ner_forward.1} parent=0 // pred_region
    _
  $region29: #{bert_ner_forward.1} parent=0 // pred_fallthru
    _
  // Predicated region
  $region30: #{bert_ner_forward.1} parent=0 // pred_check
    _
  $region31: #{bert_ner_forward.1} parent=0 // pred_check_branch
    %38 = sbr.rel (0) target = $region33
  $region32: #{bert_ner_forward.1} parent=0 // pred_region
    _
  $region33: #{bert_ner_forward.1} parent=0 // pred_fallthru
    _
  // Predicated region
  $region34: #{bert_ner_forward.1} parent=0 // pred_check
    _
  $region35: #{bert_ner_forward.1} parent=0 // pred_check_branch
    %40 = sbr.rel (0) target = $region37
  $region36: #{bert_ner_forward.1} parent=0 // pred_region
    _
  $region37: #{bert_ner_forward.1} parent=0 // pred_fallthru
    _
  // Predicated region
  $region38: #{bert_ner_forward.1} parent=0 // pred_check
    _
  $region39: #{bert_ner_forward.1} parent=0 // pred_check_branch
    %42 = sbr.rel (0) target = $region41
  $region40: #{bert_ner_forward.1} parent=0 // pred_region
    _
  $region41: #{bert_ner_forward.1} parent=0 // pred_fallthru
    _
  // Predicated region
  $region42: #{bert_ner_forward.1} parent=0 // pred_check
    _
  $region43: #{bert_ner_forward.1} parent=0 // pred_check_branch
    %44 = sbr.rel (0) target = $region45
  $region44: #{bert_ner_forward.1} parent=0 // pred_region
    _
  $region45: #{bert_ner_forward.1} parent=0 // pred_fallthru
    _
  // Predicated region
  $region46: #{bert_ner_forward.1} parent=0 // pred_check
    _
  $region47: #{bert_ner_forward.1} parent=0 // pred_check_branch
    %46 = sbr.rel (0) target = $region49
  $region48: #{bert_ner_forward.1} parent=0 // pred_region
    _
  $region49: #{bert_ner_forward.1} parent=0 // pred_fallthru
    _
  // Predicated region
  $region50: #{bert_ner_forward.1} parent=0 // pred_check
    _
  $region51: #{bert_ner_forward.1} parent=0 // pred_check_branch
    %48 = sbr.rel (0) target = $region53
  $region52: #{bert_ner_forward.1} parent=0 // pred_region
    _
  $region53: #{bert_ner_forward.1} parent=0 // pred_fallthru
    _
  // Predicated region
  $region54: #{bert_ner_forward.1} parent=0 // pred_check
    _
  $region55: #{bert_ner_forward.1} parent=0 // pred_check_branch
    %50 = sbr.rel (0) target = $region57
  $region56: #{bert_ner_forward.1} parent=0 // pred_region
    _
  $region57: #{bert_ner_forward.1} parent=0 // pred_fallthru
    _
  // Predicated region
  $region58: #{bert_ner_forward.1} parent=0 // pred_check
    _
  $region59: #{bert_ner_forward.1} parent=0 // pred_check_branch
    %52 = sbr.rel (0) target = $region61
  $region60: #{bert_ner_forward.1} parent=0 // pred_region
    _
  $region61: #{bert_ner_forward.1} parent=0 // pred_fallthru
    _
  // Predicated region
  $region62: #{bert_ner_forward.1} parent=0 // pred_check
    _
  $region63: #{bert_ner_forward.1} parent=0 // pred_check_branch
    %54 = sbr.rel (0) target = $region65
  $region64: #{bert_ner_forward.1} parent=0 // pred_region
    _
  $region65: #{bert_ner_forward.1} parent=0 // pred_fallthru
    _
  // Predicated region
  $region66: #{bert_ner_forward.1} parent=0 // pred_check
    _
  $region67: #{bert_ner_forward.1} parent=0 // pred_check_branch
    %56 = sbr.rel (0) target = $region69
  $region68: #{bert_ner_forward.1} parent=0 // pred_region
    _
  $region69: #{bert_ner_forward.1} parent=0 // pred_fallthru
    _
  // Predicated region
  $region70: #{bert_ner_forward.1} parent=0 // pred_check
    _
  $region71: #{bert_ner_forward.1} parent=0 // pred_check_branch
    %58 = sbr.rel (0) target = $region73
  $region72: #{bert_ner_forward.1} parent=0 // pred_region
    _
  $region73: #{bert_ner_forward.1} parent=0 // pred_fallthru
    _
  %v60 = vld [vmem:[%s0] sm:$0xff]
  %v61 = vld [vmem:[%s0 + $0x8] sm:$0xff]
  %v62 = vld [vmem:[%s2] sm:$0x1]
  %v63 = vld [vmem:[%s3] sm:$0x1]
  %vm64 = vcmask 261120
  %v65 = vsel %vm64, %v60, 0.0
  %66 = vadd.xlane.f32.xlu0 %v65
  %v67 = vpop.xlane.xlu0 %66
  %v68 = vsel %vm64, %v61, 0.0
  %69 = vadd.xlane.f32.xlu0 %v68
  %v70 = vpop.xlane.xlu0 %69
  %v71 = vrcp.pop 32.0
  %v72 = vmul.f32 %v67, %v71
  %v73 = vmul.f32 %v70, %v71
  %v74 = vsub.f32 %v60, %v72
  %v75 = vsub.f32 %v61, %v73
  %v76 = vmul.f32 %v74, %v74
  %v77 = vmul.f32 %v75, %v75
  %v78 = vsel %vm64, %v76, 0.0
  %79 = vadd.xlane.f32.xlu0 %v78
  %v80 = vpop.xlane.xlu0 %79
  %v81 = vsel %vm64, %v77, 0.0
  %82 = vadd.xlane.f32.xlu0 %v81
  %v83 = vpop.xlane.xlu0 %82
  %v84 = vmul.f32 %v80, %v71
  %v85 = vmul.f32 %v83, %v71
  %v86 = vadd.f32 %v84, 1e-12
  %v87 = vadd.f32 %v85, 1e-12
  %v88 = vrsqrt.pop %v86
  %v89 = vrsqrt.pop %v87
  %v90 = vmul.f32 %v74, %v88
  %v91 = vmul.f32 %v75, %v89
  %v93 = vlaneseq
  %v94 = vshrl.u32 %v93, 7
  %v95 = vsub.s32 0, %v94
  %v96 = vrot.slane %v62, %v95
  %v98 = vmul.f32 %v90, %v96
  %v99 = vmul.f32 %v91, %v96
  %v101 = vlaneseq
  %v102 = vshrl.u32 %v101, 7
  %v103 = vsub.s32 0, %v102
  %v104 = vrot.slane %v63, %v103
  %v106 = vadd.f32 %v98, %v104
  %v107 = vadd.f32 %v99, %v104
  %v108 = vld [vmem:[%s1] sm:$0x1]
  %v109 = vld [vmem:[%s1 + $0x1] sm:$0x1]
  %v110 = vpack.c.bf16 %v107, %v106
  %v111 = vld [vmem:[%s4] sm:$0xf]
  %v112 = vld [vmem:[%s4 + $0x4] sm:$0xf]
  %v113 = vld [vmem:[%s4 + $0x8] sm:$0xf]
  %v114 = vld [vmem:[%s4 + $0xc] sm:$0xf]
  %v115 = vld [vmem:[%s5] sm:$0x1]
  %v117 = vlaneseq
  %v118 = vshrl.u32 %v117, 7
  %v119 = vsub.s32 0, %v118
  %v120 = vrot.slane %v115, %v119
  %v126 = vunpack.c.l.b16 %v111
  %v127 = vunpack.c.l.b16 %v112
  %v128 = vunpack.c.l.b16 %v113
  %v129 = vunpack.c.l.b16 %v114
  %v130 = vpack.c.b16 %v127, %v126
  %v131 = vpack.c.b16 %v129, %v128
  %v135 = vsel %vm64, %v110, 0
  %137 = vmatprep.subr.bf16.mxu0 0
  %138 = vmatpush1.bf16.msra.mxu0 %v130
  %139 = vmatprep.subr.bf16.mxu0 0
  %140 = vmatpush1.bf16.msra.mxu0 %v131
  %141 = vmatprep.subr.bf16.mxu0 0
  %142 = vmatpush1.bf16.msra.mxu0 0
  %143 = vmatprep.subr.bf16.mxu0 0
  %144 = vmatpush1.bf16.msra.mxu0 0
  %145 = vmatprep.subr.bf16.mxu0 0
  %146 = vmatpush1.bf16.msra.mxu0 0
  %147 = vmatprep.subr.bf16.mxu0 0
  %148 = vmatpush1.bf16.msra.mxu0 0
  %149 = vmatprep.subr.bf16.mxu0 0
  %150 = vmatpush1.bf16.msra.mxu0 0
  %151 = vmatprep.subr.bf16.mxu0 0
  %152 = vmatpush1.bf16.msra.mxu0 0
  %153 = vmatprep.subr.bf16.mxu0 0
  %154 = vmatpush1.bf16.msra.mxu0 0
  %155 = vmatprep.subr.bf16.mxu0 0
  %156 = vmatpush1.bf16.msra.mxu0 0
  %157 = vmatprep.subr.bf16.mxu0 0
  %158 = vmatpush1.bf16.msra.mxu0 0
  %159 = vmatprep.subr.bf16.mxu0 0
  %160 = vmatpush1.bf16.msra.mxu0 0
  %161 = vmatprep.subr.bf16.mxu0 0
  %162 = vmatpush1.bf16.msra.mxu0 0
  %163 = vmatprep.subr.bf16.mxu0 0
  %164 = vmatpush1.bf16.msra.mxu0 0
  %165 = vmatprep.subr.bf16.mxu0 0
  %166 = vmatpush1.bf16.msra.mxu0 0
  %167 = vmatprep.subr.bf16.mxu0 0
  %168 = vmatpush1.bf16.msra.mxu0 0
  %169 = vmatprep.mubr.bf16.mxu0 0
  %170 = vmatmul.mubr.bf16.gmra.mrb[0].mxu0 %v135
  %v171 = vpop.f32.mrb[0].mxu0
  %v172 = vadd.f32 %v120, %v171
  %v173 = vpop.f32.mrb[0].mxu0
  %v174 = vpop.f32.mrb[0].mxu0
  %v175 = vadd.f32 %v120, %v174
  %v176 = vpop.f32.mrb[0].mxu0
  %177 = vdwg.mxu0
  %v178 = vpack.c.bf16 %v172, %v172
  %v179 = vpack.c.bf16 %v175, %v175
  %v182 = vlaneseq
  %v183 = vshrl.u32 %v182, 7
  %v184 = vsub.s32 0, %v183
  %v185 = vrot.slane %v108, %v184
  %v186 = vlaneseq
  %v187 = vshrl.u32 %v186, 7
  %v188 = vsub.s32 0, %v187
  %v189 = vrot.slane %v109, %v188
  %193 = vrot.lane.b32.xlu0 %v178, 96
  %v194 = vpop.permute.xlu0 %193
  %vm195 = vcmask 130048
  %v197 = vsel %vm195, %v178, 0
  %v200 = vsel %vm195, %v194, 0
  %202 = vmatprep.subr.bf16.mxu0 0
  %203 = vmatpush1.bf16.xpose.msra.mxu0 %v200
  %204 = vmatprep.subr.bf16.mxu0 0
  %205 = vmatpush1.bf16.xpose.msra.mxu0 0
  %206 = vmatprep.subr.bf16.mxu0 0
  %207 = vmatpush1.bf16.xpose.msra.mxu0 0
  %208 = vmatprep.subr.bf16.mxu0 0
  %209 = vmatpush1.bf16.xpose.msra.mxu0 0
  %210 = vmatprep.subr.bf16.mxu0 0
  %211 = vmatpush1.bf16.xpose.msra.mxu0 0
  %212 = vmatprep.subr.bf16.mxu0 0
  %213 = vmatpush1.bf16.xpose.msra.mxu0 0
  %214 = vmatprep.subr.bf16.mxu0 0
  %215 = vmatpush1.bf16.xpose.msra.mxu0 0
  %216 = vmatprep.subr.bf16.mxu0 0
  %217 = vmatpush1.bf16.xpose.msra.mxu0 0
  %218 = vmatprep.subr.bf16.mxu0 0
  %219 = vmatpush1.bf16.xpose.msra.mxu0 0
  %220 = vmatprep.subr.bf16.mxu0 0
  %221 = vmatpush1.bf16.xpose.msra.mxu0 0
  %222 = vmatprep.subr.bf16.mxu0 0
  %223 = vmatpush1.bf16.xpose.msra.mxu0 0
  %224 = vmatprep.subr.bf16.mxu0 0
  %225 = vmatpush1.bf16.xpose.msra.mxu0 0
  %226 = vmatprep.subr.bf16.mxu0 0
  %227 = vmatpush1.bf16.xpose.msra.mxu0 0
  %228 = vmatprep.subr.bf16.mxu0 0
  %229 = vmatpush1.bf16.xpose.msra.mxu0 0
  %230 = vmatprep.subr.bf16.mxu0 0
  %231 = vmatpush1.bf16.xpose.msra.mxu0 0
  %232 = vmatprep.subr.bf16.mxu0 0
  %233 = vmatpush1.bf16.xpose.msra.mxu0 0
  %234 = vmatprep.mubr.bf16.mxu0 0
  %235 = vmatmul.mubr.bf16.gmra.mrb[0].mxu0 %v197
  %v236 = vpop.f32.mrb[0].mxu0
  %v237 = vadd.f32 %v185, %v236
  %v238 = vpop.f32.mrb[0].mxu0
  %v239 = vpop.f32.mrb[0].mxu0
  %v240 = vpop.f32.mrb[0].mxu0
  %241 = vdwg.mxu0
  %243 = vrot.lane.b32.xlu0 %v179, 96
  %v244 = vpop.permute.xlu0 %243
  %v246 = vsel %vm195, %v179, 0
  %v249 = vsel %vm195, %v244, 0
  %251 = vmatprep.subr.bf16.mxu0 0
  %252 = vmatpush1.bf16.xpose.msra.mxu0 %v249
  %253 = vmatprep.subr.bf16.mxu0 0
  %254 = vmatpush1.bf16.xpose.msra.mxu0 0
  %255 = vmatprep.subr.bf16.mxu0 0
  %256 = vmatpush1.bf16.xpose.msra.mxu0 0
  %257 = vmatprep.subr.bf16.mxu0 0
  %258 = vmatpush1.bf16.xpose.msra.mxu0 0
  %259 = vmatprep.subr.bf16.mxu0 0
  %260 = vmatpush1.bf16.xpose.msra.mxu0 0
  %261 = vmatprep.subr.bf16.mxu0 0
  %262 = vmatpush1.bf16.xpose.msra.mxu0 0
  %263 = vmatprep.subr.bf16.mxu0 0
  %264 = vmatpush1.bf16.xpose.msra.mxu0 0
  %265 = vmatprep.subr.bf16.mxu0 0
  %266 = vmatpush1.bf16.xpose.msra.mxu0 0
  %267 = vmatprep.subr.bf16.mxu0 0
  %268 = vmatpush1.bf16.xpose.msra.mxu0 0
  %269 = vmatprep.subr.bf16.mxu0 0
  %270 = vmatpush1.bf16.xpose.msra.mxu0 0
  %271 = vmatprep.subr.bf16.mxu0 0
  %272 = vmatpush1.bf16.xpose.msra.mxu0 0
  %273 = vmatprep.subr.bf16.mxu0 0
  %274 = vmatpush1.bf16.xpose.msra.mxu0 0
  %275 = vmatprep.subr.bf16.mxu0 0
  %276 = vmatpush1.bf16.xpose.msra.mxu0 0
  %277 = vmatprep.subr.bf16.mxu0 0
  %278 = vmatpush1.bf16.xpose.msra.mxu0 0
  %279 = vmatprep.subr.bf16.mxu0 0
  %280 = vmatpush1.bf16.xpose.msra.mxu0 0
  %281 = vmatprep.subr.bf16.mxu0 0
  %282 = vmatpush1.bf16.xpose.msra.mxu0 0
  %283 = vmatprep.mubr.bf16.mxu0 0
  %284 = vmatmul.mubr.bf16.gmra.mrb[0].mxu0 %v246
  %v285 = vpop.f32.mrb[0].mxu0
  %v286 = vadd.f32 %v189, %v285
  %v287 = vpop.f32.mrb[0].mxu0
  %v288 = vpop.f32.mrb[0].mxu0
  %v289 = vpop.f32.mrb[0].mxu0
  %290 = vdwg.mxu0
  %vm291 = vcmask 64512
  %v292 = vsel %vm291, %v237, -inf
  %293 = vmax.xlane.f32.xlu0 %v292
  %v294 = vpop.xlane.xlu0 %293
  %v295 = vsel %vm291, %v286, -inf
  %296 = vmax.xlane.f32.xlu0 %v295
  %v297 = vpop.xlane.xlu0 %296
  %v298 = vsub.f32 %v237, %v294
  %v299 = vsub.f32 %v286, %v297
  %v300 = vmul.f32 %v298, 1.442695
  %v301 = vpow.pop %v300
  %v302 = vmul.f32 %v299, 1.442695
  %v303 = vpow.pop %v302
  %v304 = vsel %vm291, %v301, 0.0
  %305 = vadd.xlane.f32.xlu0 %v304
  %v306 = vpop.xlane.xlu0 %305
  %v307 = vsel %vm291, %v303, 0.0
  %308 = vadd.xlane.f32.xlu0 %v307
  %v309 = vpop.xlane.xlu0 %308
  %v310 = vrcp.pop %v306
  %v311 = vrcp.pop %v309
  %v312 = vmul.f32 %v301, %v310
  %v313 = vmul.f32 %v303, %v311
  %v314 = vpack.c.bf16 %v312, %v312
  %v315 = vpack.c.bf16 %v313, %v313
  %316 = vrot.lane.b32.xlu0 %v178, 64
  %v317 = vpop.permute.xlu0 %316
  %v319 = vsel %vm291, %v314, 0
  %vm321 = vcmask 1043456
  %v323 = vsel %vm321, %v317, 0
  %325 = vmatprep.subr.bf16.mxu0 0
  %326 = vmatpush1.bf16.msra.mxu0 %v323
  %327 = vmatprep.subr.bf16.mxu0 0
  %328 = vmatpush1.bf16.msra.mxu0 0
  %329 = vmatprep.subr.bf16.mxu0 0
  %330 = vmatpush1.bf16.msra.mxu0 0
  %331 = vmatprep.subr.bf16.mxu0 0
  %332 = vmatpush1.bf16.msra.mxu0 0
  %333 = vmatprep.subr.bf16.mxu0 0
  %334 = vmatpush1.bf16.msra.mxu0 0
  %335 = vmatprep.subr.bf16.mxu0 0
  %336 = vmatpush1.bf16.msra.mxu0 0
  %337 = vmatprep.subr.bf16.mxu0 0
  %338 = vmatpush1.bf16.msra.mxu0 0
  %339 = vmatprep.subr.bf16.mxu0 0
  %340 = vmatpush1.bf16.msra.mxu0 0
  %341 = vmatprep.subr.bf16.mxu0 0
  %342 = vmatpush1.bf16.msra.mxu0 0
  %343 = vmatprep.subr.bf16.mxu0 0
  %344 = vmatpush1.bf16.msra.mxu0 0
  %345 = vmatprep.subr.bf16.mxu0 0
  %346 = vmatpush1.bf16.msra.mxu0 0
  %347 = vmatprep.subr.bf16.mxu0 0
  %348 = vmatpush1.bf16.msra.mxu0 0
  %349 = vmatprep.subr.bf16.mxu0 0
  %350 = vmatpush1.bf16.msra.mxu0 0
  %351 = vmatprep.subr.bf16.mxu0 0
  %352 = vmatpush1.bf16.msra.mxu0 0
  %353 = vmatprep.subr.bf16.mxu0 0
  %354 = vmatpush1.bf16.msra.mxu0 0
  %355 = vmatprep.subr.bf16.mxu0 0
  %356 = vmatpush1.bf16.msra.mxu0 0
  %357 = vmatprep.mubr.bf16.mxu0 0
  %358 = vmatmul.mubr.bf16.gmra.mrb[0].mxu0 %v319
  %v359 = vpop.f32.mrb[0].mxu0
  %v360 = vadd.f32 0.0, %v359
  %v361 = vpop.f32.mrb[0].mxu0
  %v362 = vpop.f32.mrb[0].mxu0
  %v363 = vpop.f32.mrb[0].mxu0
  %364 = vdwg.mxu0
  %365 = vrot.lane.b32.xlu0 %v179, 64
  %v366 = vpop.permute.xlu0 %365
  %v368 = vsel %vm291, %v315, 0
  %v371 = vsel %vm321, %v366, 0
  %373 = vmatprep.subr.bf16.mxu0 0
  %374 = vmatpush1.bf16.msra.mxu0 %v371
  %375 = vmatprep.subr.bf16.mxu0 0
  %376 = vmatpush1.bf16.msra.mxu0 0
  %377 = vmatprep.subr.bf16.mxu0 0
  %378 = vmatpush1.bf16.msra.mxu0 0
  %379 = vmatprep.subr.bf16.mxu0 0
  %380 = vmatpush1.bf16.msra.mxu0 0
  %381 = vmatprep.subr.bf16.mxu0 0
  %382 = vmatpush1.bf16.msra.mxu0 0
  %383 = vmatprep.subr.bf16.mxu0 0
  %384 = vmatpush1.bf16.msra.mxu0 0
  %385 = vmatprep.subr.bf16.mxu0 0
  %386 = vmatpush1.bf16.msra.mxu0 0
  %387 = vmatprep.subr.bf16.mxu0 0
  %388 = vmatpush1.bf16.msra.mxu0 0
  %389 = vmatprep.subr.bf16.mxu0 0
  %390 = vmatpush1.bf16.msra.mxu0 0
  %391 = vmatprep.subr.bf16.mxu0 0
  %392 = vmatpush1.bf16.msra.mxu0 0
  %393 = vmatprep.subr.bf16.mxu0 0
  %394 = vmatpush1.bf16.msra.mxu0 0
  %395 = vmatprep.subr.bf16.mxu0 0
  %396 = vmatpush1.bf16.msra.mxu0 0
  %397 = vmatprep.subr.bf16.mxu0 0
  %398 = vmatpush1.bf16.msra.mxu0 0
  %399 = vmatprep.subr.bf16.mxu0 0
  %400 = vmatpush1.bf16.msra.mxu0 0
  %401 = vmatprep.subr.bf16.mxu0 0
  %402 = vmatpush1.bf16.msra.mxu0 0
  %403 = vmatprep.subr.bf16.mxu0 0
  %404 = vmatpush1.bf16.msra.mxu0 0
  %405 = vmatprep.mubr.bf16.mxu0 0
  %406 = vmatmul.mubr.bf16.gmra.mrb[0].mxu0 %v368
  %v407 = vpop.f32.mrb[0].mxu0
  %v408 = vadd.f32 0.0, %v407
  %v409 = vpop.f32.mrb[0].mxu0
  %v410 = vpop.f32.mrb[0].mxu0
  %v411 = vpop.f32.mrb[0].mxu0
  %412 = vdwg.mxu0
  %413 = vrot.lane.b32.xlu0 %v178, 112
  %v414 = vpop.permute.xlu0 %413
  %415 = vrot.lane.b32.xlu0 %v178, 80
  %v416 = vpop.permute.xlu0 %415
  %v418 = vsel %vm195, %v414, 0
  %v421 = vsel %vm195, %v416, 0
  %423 = vmatprep.subr.bf16.mxu0 0
  %424 = vmatpush1.bf16.xpose.msra.mxu0 %v421
  %425 = vmatprep.subr.bf16.mxu0 0
  %426 = vmatpush1.bf16.xpose.msra.mxu0 0
  %427 = vmatprep.subr.bf16.mxu0 0
  %428 = vmatpush1.bf16.xpose.msra.mxu0 0
  %429 = vmatprep.subr.bf16.mxu0 0
  %430 = vmatpush1.bf16.xpose.msra.mxu0 0
  %431 = vmatprep.subr.bf16.mxu0 0
  %432 = vmatpush1.bf16.xpose.msra.mxu0 0
  %433 = vmatprep.subr.bf16.mxu0 0
  %434 = vmatpush1.bf16.xpose.msra.mxu0 0
  %435 = vmatprep.subr.bf16.mxu0 0
  %436 = vmatpush1.bf16.xpose.msra.mxu0 0
  %437 = vmatprep.subr.bf16.mxu0 0
  %438 = vmatpush1.bf16.xpose.msra.mxu0 0
  %439 = vmatprep.subr.bf16.mxu0 0
  %440 = vmatpush1.bf16.xpose.msra.mxu0 0
  %441 = vmatprep.subr.bf16.mxu0 0
  %442 = vmatpush1.bf16.xpose.msra.mxu0 0
  %443 = vmatprep.subr.bf16.mxu0 0
  %444 = vmatpush1.bf16.xpose.msra.mxu0 0
  %445 = vmatprep.subr.bf16.mxu0 0
  %446 = vmatpush1.bf16.xpose.msra.mxu0 0
  %447 = vmatprep.subr.bf16.mxu0 0
  %448 = vmatpush1.bf16.xpose.msra.mxu0 0
  %449 = vmatprep.subr.bf16.mxu0 0
  %450 = vmatpush1.bf16.xpose.msra.mxu0 0
  %451 = vmatprep.subr.bf16.mxu0 0
  %452 = vmatpush1.bf16.xpose.msra.mxu0 0
  %453 = vmatprep.subr.bf16.mxu0 0
  %454 = vmatpush1.bf16.xpose.msra.mxu0 0
  %455 = vmatprep.mubr.bf16.mxu0 0
  %456 = vmatmul.mubr.bf16.gmra.mrb[0].mxu0 %v418
  %v457 = vpop.f32.mrb[0].mxu0
  %v458 = vadd.f32 %v185, %v457
  %v459 = vpop.f32.mrb[0].mxu0
  %v460 = vpop.f32.mrb[0].mxu0
  %v461 = vpop.f32.mrb[0].mxu0
  %462 = vdwg.mxu0
  %463 = vrot.lane.b32.xlu0 %v179, 112
  %v464 = vpop.permute.xlu0 %463
  %465 = vrot.lane.b32.xlu0 %v179, 80
  %v466 = vpop.permute.xlu0 %465
  %v468 = vsel %vm195, %v464, 0
  %v471 = vsel %vm195, %v466, 0
  %473 = vmatprep.subr.bf16.mxu0 0
  %474 = vmatpush1.bf16.xpose.msra.mxu0 %v471
  %475 = vmatprep.subr.bf16.mxu0 0
  %476 = vmatpush1.bf16.xpose.msra.mxu0 0
  %477 = vmatprep.subr.bf16.mxu0 0
  %478 = vmatpush1.bf16.xpose.msra.mxu0 0
  %479 = vmatprep.subr.bf16.mxu0 0
  %480 = vmatpush1.bf16.xpose.msra.mxu0 0
  %481 = vmatprep.subr.bf16.mxu0 0
  %482 = vmatpush1.bf16.xpose.msra.mxu0 0
  %483 = vmatprep.subr.bf16.mxu0 0
  %484 = vmatpush1.bf16.xpose.msra.mxu0 0
  %485 = vmatprep.subr.bf16.mxu0 0
  %486 = vmatpush1.bf16.xpose.msra.mxu0 0
  %487 = vmatprep.subr.bf16.mxu0 0
  %488 = vmatpush1.bf16.xpose.msra.mxu0 0
  %489 = vmatprep.subr.bf16.mxu0 0
  %490 = vmatpush1.bf16.xpose.msra.mxu0 0
  %491 = vmatprep.subr.bf16.mxu0 0
  %492 = vmatpush1.bf16.xpose.msra.mxu0 0
  %493 = vmatprep.subr.bf16.mxu0 0
  %494 = vmatpush1.bf16.xpose.msra.mxu0 0
  %495 = vmatprep.subr.bf16.mxu0 0
  %496 = vmatpush1.bf16.xpose.msra.mxu0 0
  %497 = vmatprep.subr.bf16.mxu0 0
  %498 = vmatpush1.bf16.xpose.msra.mxu0 0
  %499 = vmatprep.subr.bf16.mxu0 0
  %500 = vmatpush1.bf16.xpose.msra.mxu0 0
  %501 = vmatprep.subr.bf16.mxu0 0
  %502 = vmatpush1.bf16.xpose.msra.mxu0 0
  %503 = vmatprep.subr.bf16.mxu0 0
  %504 = vmatpush1.bf16.xpose.msra.mxu0 0
  %505 = vmatprep.mubr.bf16.mxu0 0
  %506 = vmatmul.mubr.bf16.gmra.mrb[0].mxu0 %v468
  %v507 = vpop.f32.mrb[0].mxu0
  %v508 = vadd.f32 %v189, %v507
  %v509 = vpop.f32.mrb[0].mxu0
  %v510 = vpop.f32.mrb[0].mxu0
  %v511 = vpop.f32.mrb[0].mxu0
  %512 = vdwg.mxu0
  %v513 = vsel %vm291, %v458, -inf
  %514 = vmax.xlane.f32.xlu0 %v513
  %v515 = vpop.xlane.xlu0 %514
  %v516 = vsel %vm291, %v508, -inf
  %517 = vmax.xlane.f32.xlu0 %v516
  %v518 = vpop.xlane.xlu0 %517
  %v519 = vsub.f32 %v458, %v515
  %v520 = vsub.f32 %v508, %v518
  %v521 = vmul.f32 %v519, 1.442695
  %v522 = vpow.pop %v521
  %v523 = vmul.f32 %v520, 1.442695
  %v524 = vpow.pop %v523
  %v525 = vsel %vm291, %v522, 0.0
  %526 = vadd.xlane.f32.xlu0 %v525
  %v527 = vpop.xlane.xlu0 %526
  %v528 = vsel %vm291, %v524, 0.0
  %529 = vadd.xlane.f32.xlu0 %v528
  %v530 = vpop.xlane.xlu0 %529
  %v531 = vrcp.pop %v527
  %v532 = vrcp.pop %v530
  %v533 = vmul.f32 %v522, %v531
  %v534 = vmul.f32 %v524, %v532
  %v535 = vpack.c.bf16 %v533, %v533
  %v536 = vpack.c.bf16 %v534, %v534
  %537 = vrot.lane.b32.xlu0 %v178, 48
  %v538 = vpop.permute.xlu0 %537
  %v540 = vsel %vm291, %v535, 0
  %v543 = vsel %vm321, %v538, 0
  %545 = vmatprep.subr.bf16.mxu0 0
  %546 = vmatpush1.bf16.msra.mxu0 %v543
  %547 = vmatprep.subr.bf16.mxu0 0
  %548 = vmatpush1.bf16.msra.mxu0 0
  %549 = vmatprep.subr.bf16.mxu0 0
  %550 = vmatpush1.bf16.msra.mxu0 0
  %551 = vmatprep.subr.bf16.mxu0 0
  %552 = vmatpush1.bf16.msra.mxu0 0
  %553 = vmatprep.subr.bf16.mxu0 0
  %554 = vmatpush1.bf16.msra.mxu0 0
  %555 = vmatprep.subr.bf16.mxu0 0
  %556 = vmatpush1.bf16.msra.mxu0 0
  %557 = vmatprep.subr.bf16.mxu0 0
  %558 = vmatpush1.bf16.msra.mxu0 0
  %559 = vmatprep.subr.bf16.mxu0 0
  %560 = vmatpush1.bf16.msra.mxu0 0
  %561 = vmatprep.subr.bf16.mxu0 0
  %562 = vmatpush1.bf16.msra.mxu0 0
  %563 = vmatprep.subr.bf16.mxu0 0
  %564 = vmatpush1.bf16.msra.mxu0 0
  %565 = vmatprep.subr.bf16.mxu0 0
  %566 = vmatpush1.bf16.msra.mxu0 0
  %567 = vmatprep.subr.bf16.mxu0 0
  %568 = vmatpush1.bf16.msra.mxu0 0
  %569 = vmatprep.subr.bf16.mxu0 0
  %570 = vmatpush1.bf16.msra.mxu0 0
  %571 = vmatprep.subr.bf16.mxu0 0
  %572 = vmatpush1.bf16.msra.mxu0 0
  %573 = vmatprep.subr.bf16.mxu0 0
  %574 = vmatpush1.bf16.msra.mxu0 0
  %575 = vmatprep.subr.bf16.mxu0 0
  %576 = vmatpush1.bf16.msra.mxu0 0
  %577 = vmatprep.mubr.bf16.mxu0 0
  %578 = vmatmul.mubr.bf16.gmra.mrb[0].mxu0 %v540
  %v579 = vpop.f32.mrb[0].mxu0
  %v580 = vadd.f32 0.0, %v579
  %v581 = vpop.f32.mrb[0].mxu0
  %v582 = vpop.f32.mrb[0].mxu0
  %v583 = vpop.f32.mrb[0].mxu0
  %584 = vdwg.mxu0
  %585 = vrot.lane.b32.xlu0 %v179, 48
  %v586 = vpop.permute.xlu0 %585
  %v588 = vsel %vm291, %v536, 0
  %v591 = vsel %vm321, %v586, 0
  %593 = vmatprep.subr.bf16.mxu0 0
  %594 = vmatpush1.bf16.msra.mxu0 %v591
  %595 = vmatprep.subr.bf16.mxu0 0
  %596 = vmatpush1.bf16.msra.mxu0 0
  %597 = vmatprep.subr.bf16.mxu0 0
  %598 = vmatpush1.bf16.msra.mxu0 0
  %599 = vmatprep.subr.bf16.mxu0 0
  %600 = vmatpush1.bf16.msra.mxu0 0
  %601 = vmatprep.subr.bf16.mxu0 0
  %602 = vmatpush1.bf16.msra.mxu0 0
  %603 = vmatprep.subr.bf16.mxu0 0
  %604 = vmatpush1.bf16.msra.mxu0 0
  %605 = vmatprep.subr.bf16.mxu0 0
  %606 = vmatpush1.bf16.msra.mxu0 0
  %607 = vmatprep.subr.bf16.mxu0 0
  %608 = vmatpush1.bf16.msra.mxu0 0
  %609 = vmatprep.subr.bf16.mxu0 0
  %610 = vmatpush1.bf16.msra.mxu0 0
  %611 = vmatprep.subr.bf16.mxu0 0
  %612 = vmatpush1.bf16.msra.mxu0 0
  %613 = vmatprep.subr.bf16.mxu0 0
  %614 = vmatpush1.bf16.msra.mxu0 0
  %615 = vmatprep.subr.bf16.mxu0 0
  %616 = vmatpush1.bf16.msra.mxu0 0
  %617 = vmatprep.subr.bf16.mxu0 0
  %618 = vmatpush1.bf16.msra.mxu0 0
  %619 = vmatprep.subr.bf16.mxu0 0
  %620 = vmatpush1.bf16.msra.mxu0 0
  %621 = vmatprep.subr.bf16.mxu0 0
  %622 = vmatpush1.bf16.msra.mxu0 0
  %623 = vmatprep.subr.bf16.mxu0 0
  %624 = vmatpush1.bf16.msra.mxu0 0
  %625 = vmatprep.mubr.bf16.mxu0 0
  %626 = vmatmul.mubr.bf16.gmra.mrb[0].mxu0 %v588
  %v627 = vpop.f32.mrb[0].mxu0
  %v628 = vadd.f32 0.0, %v627
  %v629 = vpop.f32.mrb[0].mxu0
  %v630 = vpop.f32.mrb[0].mxu0
  %v631 = vpop.f32.mrb[0].mxu0
  %632 = vdwg.mxu0
  %635 = vrot.lane.b32.xlu0 %v580, 16
  %v636 = vpop.permute.xlu0 %635
  %637 = vrot.lane.b32.xlu0 %v628, 16
  %v638 = vpop.permute.xlu0 %637
  %v641 = vsel %vm195, %v360, %v636
  %v642 = vsel %vm195, %v408, %v638
  %v643 = vpack.c.bf16 %v642, %v641
  %v644 = vld [vmem:[%s6] sm:$0xf]
  %v645 = vld [vmem:[%s6 + $0x4] sm:$0xf]
  %v646 = vld [vmem:[%s6 + $0x8] sm:$0xf]
  %v647 = vld [vmem:[%s6 + $0xc] sm:$0xf]
  %v648 = vld [vmem:[%s7] sm:$0x1]
  %v650 = vlaneseq
  %v651 = vshrl.u32 %v650, 7
  %v652 = vsub.s32 0, %v651
  %v653 = vrot.slane %v648, %v652
  %v659 = vunpack.c.l.b16 %v644
  %v660 = vunpack.c.l.b16 %v645
  %v661 = vunpack.c.l.b16 %v646
  %v662 = vunpack.c.l.b16 %v647
  %v663 = vpack.c.b16 %v660, %v659
  %v664 = vpack.c.b16 %v662, %v661
  %v668 = vsel %vm64, %v643, 0
  %670 = vmatprep.subr.bf16.mxu0 0
  %671 = vmatpush1.bf16.msra.mxu0 %v663
  %672 = vmatprep.subr.bf16.mxu0 0
  %673 = vmatpush1.bf16.msra.mxu0 %v664
  %674 = vmatprep.subr.bf16.mxu0 0
  %675 = vmatpush1.bf16.msra.mxu0 0
  %676 = vmatprep.subr.bf16.mxu0 0
  %677 = vmatpush1.bf16.msra.mxu0 0
  %678 = vmatprep.subr.bf16.mxu0 0
  %679 = vmatpush1.bf16.msra.mxu0 0
  %680 = vmatprep.subr.bf16.mxu0 0
  %681 = vmatpush1.bf16.msra.mxu0 0
  %682 = vmatprep.subr.bf16.mxu0 0
  %683 = vmatpush1.bf16.msra.mxu0 0
  %684 = vmatprep.subr.bf16.mxu0 0
  %685 = vmatpush1.bf16.msra.mxu0 0
  %686 = vmatprep.subr.bf16.mxu0 0
  %687 = vmatpush1.bf16.msra.mxu0 0
  %688 = vmatprep.subr.bf16.mxu0 0
  %689 = vmatpush1.bf16.msra.mxu0 0
  %690 = vmatprep.subr.bf16.mxu0 0
  %691 = vmatpush1.bf16.msra.mxu0 0
  %692 = vmatprep.subr.bf16.mxu0 0
  %693 = vmatpush1.bf16.msra.mxu0 0
  %694 = vmatprep.subr.bf16.mxu0 0
  %695 = vmatpush1.bf16.msra.mxu0 0
  %696 = vmatprep.subr.bf16.mxu0 0
  %697 = vmatpush1.bf16.msra.mxu0 0
  %698 = vmatprep.subr.bf16.mxu0 0
  %699 = vmatpush1.bf16.msra.mxu0 0
  %700 = vmatprep.subr.bf16.mxu0 0
  %701 = vmatpush1.bf16.msra.mxu0 0
  %702 = vmatprep.mubr.bf16.mxu0 0
  %703 = vmatmul.mubr.bf16.gmra.mrb[0].mxu0 %v668
  %v704 = vpop.f32.mrb[0].mxu0
  %v705 = vadd.f32 %v653, %v704
  %v706 = vpop.f32.mrb[0].mxu0
  %v707 = vpop.f32.mrb[0].mxu0
  %v708 = vadd.f32 %v653, %v707
  %v709 = vpop.f32.mrb[0].mxu0
  %710 = vdwg.mxu0
  %v711 = vadd.f32 %v106, %v705
  %v712 = vadd.f32 %v107, %v708
  %v713 = vld [vmem:[%s8] sm:$0x1]
  %v714 = vld [vmem:[%s9] sm:$0x1]
  %v715 = vsel %vm64, %v711, 0.0
  %716 = vadd.xlane.f32.xlu0 %v715
  %v717 = vpop.xlane.xlu0 %716
  %v718 = vsel %vm64, %v712, 0.0
  %719 = vadd.xlane.f32.xlu0 %v718
  %v720 = vpop.xlane.xlu0 %719
  %v721 = vmul.f32 %v717, %v71
  %v722 = vmul.f32 %v720, %v71
  %v723 = vsub.f32 %v711, %v721
  %v724 = vsub.f32 %v712, %v722
  %v725 = vmul.f32 %v723, %v723
  %v726 = vmul.f32 %v724, %v724
  %v727 = vsel %vm64, %v725, 0.0
  %728 = vadd.xlane.f32.xlu0 %v727
  %v729 = vpop.xlane.xlu0 %728
  %v730 = vsel %vm64, %v726, 0.0
  %731 = vadd.xlane.f32.xlu0 %v730
  %v732 = vpop.xlane.xlu0 %731
  %v733 = vmul.f32 %v729, %v71
  %v734 = vmul.f32 %v732, %v71
  %v735 = vadd.f32 %v733, 1e-12
  %v736 = vadd.f32 %v734, 1e-12
  %v737 = vrsqrt.pop %v735
  %v738 = vrsqrt.pop %v736
  %v739 = vmul.f32 %v723, %v737
  %v740 = vmul.f32 %v724, %v738
  %v742 = vlaneseq
  %v743 = vshrl.u32 %v742, 7
  %v744 = vsub.s32 0, %v743
  %v745 = vrot.slane %v713, %v744
  %v747 = vmul.f32 %v739, %v745
  %v748 = vmul.f32 %v740, %v745
  %v750 = vlaneseq
  %v751 = vshrl.u32 %v750, 7
  %v752 = vsub.s32 0, %v751
  %v753 = vrot.slane %v714, %v752
  %v755 = vadd.f32 %v747, %v753
  %v756 = vadd.f32 %v748, %v753
  %v757 = vpack.c.bf16 %v756, %v755
  %v758 = vld [vmem:[%s10] sm:$0xf]
  %v759 = vld [vmem:[%s10 + $0x4] sm:$0xf]
  %v760 = vld [vmem:[%s10 + $0x8] sm:$0xf]
  %v761 = vld [vmem:[%s10 + $0xc] sm:$0xf]
  %v762 = vld [vmem:[%s11] sm:$0x1]
  %v764 = vlaneseq
  %v765 = vshrl.u32 %v764, 7
  %v766 = vsub.s32 0, %v765
  %v767 = vrot.slane %v762, %v766
  %v773 = vunpack.c.l.b16 %v758
  %v774 = vunpack.c.l.b16 %v759
  %v775 = vunpack.c.l.b16 %v760
  %v776 = vunpack.c.l.b16 %v761
  %v777 = vpack.c.b16 %v774, %v773
  %v778 = vpack.c.b16 %v776, %v775
  %v782 = vsel %vm64, %v757, 0
  %784 = vmatprep.subr.bf16.mxu0 0
  %785 = vmatpush1.bf16.msra.mxu0 %v777
  %786 = vmatprep.subr.bf16.mxu0 0
  %787 = vmatpush1.bf16.msra.mxu0 %v778
  %788 = vmatprep.subr.bf16.mxu0 0
  %789 = vmatpush1.bf16.msra.mxu0 0
  %790 = vmatprep.subr.bf16.mxu0 0
  %791 = vmatpush1.bf16.msra.mxu0 0
  %792 = vmatprep.subr.bf16.mxu0 0
  %793 = vmatpush1.bf16.msra.mxu0 0
  %794 = vmatprep.subr.bf16.mxu0 0
  %795 = vmatpush1.bf16.msra.mxu0 0
  %796 = vmatprep.subr.bf16.mxu0 0
  %797 = vmatpush1.bf16.msra.mxu0 0
  %798 = vmatprep.subr.bf16.mxu0 0
  %799 = vmatpush1.bf16.msra.mxu0 0
  %800 = vmatprep.subr.bf16.mxu0 0
  %801 = vmatpush1.bf16.msra.mxu0 0
  %802 = vmatprep.subr.bf16.mxu0 0
  %803 = vmatpush1.bf16.msra.mxu0 0
  %804 = vmatprep.subr.bf16.mxu0 0
  %805 = vmatpush1.bf16.msra.mxu0 0
  %806 = vmatprep.subr.bf16.mxu0 0
  %807 = vmatpush1.bf16.msra.mxu0 0
  %808 = vmatprep.subr.bf16.mxu0 0
  %809 = vmatpush1.bf16.msra.mxu0 0
  %810 = vmatprep.subr.bf16.mxu0 0
  %811 = vmatpush1.bf16.msra.mxu0 0
  %812 = vmatprep.subr.bf16.mxu0 0
  %813 = vmatpush1.bf16.msra.mxu0 0
  %814 = vmatprep.subr.bf16.mxu0 0
  %815 = vmatpush1.bf16.msra.mxu0 0
  %816 = vmatprep.mubr.bf16.mxu0 0
  %817 = vmatmul.mubr.bf16.gmra.mrb[0].mxu0 %v782
  %v818 = vpop.f32.mrb[0].mxu0
  %v819 = vadd.f32 %v767, %v818
  %v820 = vpop.f32.mrb[0].mxu0
  %v821 = vpop.f32.mrb[0].mxu0
  %v822 = vadd.f32 %v767, %v821
  %v823 = vpop.f32.mrb[0].mxu0
  %824 = vdwg.mxu0
  %v825 = vmul.f32 %v819, %v819
  %v826 = vmul.f32 %v822, %v822
  %v827 = vmul.f32 %v819, %v825
  %v828 = vmul.f32 %v822, %v826
  %v829 = vmul.f32 %v827, 0.044715
  %v830 = vmul.f32 %v828, 0.044715
  %v831 = vadd.f32 %v819, %v829
  %v832 = vadd.f32 %v822, %v830
  %v833 = vmul.f32 %v831, 0.7978846
  %v834 = vmul.f32 %v832, 0.7978846
  %v835 = vtanh.pop %v833
  %v836 = vtanh.pop %v834
  %v837 = vadd.f32 %v835, 1.0
  %v838 = vadd.f32 %v836, 1.0
  %v839 = vmul.f32 %v837, 0.5
  %v840 = vmul.f32 %v838, 0.5
  %v841 = vmul.f32 %v819, %v839
  %v842 = vmul.f32 %v822, %v840
  %v843 = vpack.c.bf16 %v842, %v841
  %v844 = vld [vmem:[%s12] sm:$0xf]
  %v845 = vld [vmem:[%s12 + $0x4] sm:$0xf]
  %v846 = vld [vmem:[%s12 + $0x8] sm:$0xf]
  %v847 = vld [vmem:[%s12 + $0xc] sm:$0xf]
  %v848 = vld [vmem:[%s12 + $0x10] sm:$0xf]
  %v849 = vld [vmem:[%s12 + $0x14] sm:$0xf]
  %v850 = vld [vmem:[%s12 + $0x18] sm:$0xf]
  %v851 = vld [vmem:[%s12 + $0x1c] sm:$0xf]
  %v852 = vld [vmem:[%s13] sm:$0x1]
  %v854 = vlaneseq
  %v855 = vshrl.u32 %v854, 7
  %v856 = vsub.s32 0, %v855
  %v857 = vrot.slane %v852, %v856
  %v867 = vunpack.c.l.b16 %v844
  %v868 = vunpack.c.l.b16 %v845
  %v869 = vunpack.c.l.b16 %v846
  %v870 = vunpack.c.l.b16 %v847
  %v871 = vunpack.c.l.b16 %v848
  %v872 = vunpack.c.l.b16 %v849
  %v873 = vunpack.c.l.b16 %v850
  %v874 = vunpack.c.l.b16 %v851
  %v875 = vpack.c.b16 %v868, %v867
  %v876 = vpack.c.b16 %v870, %v869
  %v877 = vpack.c.b16 %v872, %v871
  %v878 = vpack.c.b16 %v874, %v873
  %vm883 = vcmask 523264
  %v885 = vsel %vm883, %v843, 0
  %887 = vmatprep.subr.bf16.mxu0 0
  %888 = vmatpush1.bf16.msra.mxu0 %v875
  %889 = vmatprep.subr.bf16.mxu0 0
  %890 = vmatpush1.bf16.msra.mxu0 %v876
  %891 = vmatprep.subr.bf16.mxu0 0
  %892 = vmatpush1.bf16.msra.mxu0 %v877
  %893 = vmatprep.subr.bf16.mxu0 0
  %894 = vmatpush1.bf16.msra.mxu0 %v878
  %895 = vmatprep.subr.bf16.mxu0 0
  %896 = vmatpush1.bf16.msra.mxu0 0
  %897 = vmatprep.subr.bf16.mxu0 0
  %898 = vmatpush1.bf16.msra.mxu0 0
  %899 = vmatprep.subr.bf16.mxu0 0
  %900 = vmatpush1.bf16.msra.mxu0 0
  %901 = vmatprep.subr.bf16.mxu0 0
  %902 = vmatpush1.bf16.msra.mxu0 0
  %903 = vmatprep.subr.bf16.mxu0 0
  %904 = vmatpush1.bf16.msra.mxu0 0
  %905 = vmatprep.subr.bf16.mxu0 0
  %906 = vmatpush1.bf16.msra.mxu0 0
  %907 = vmatprep.subr.bf16.mxu0 0
  %908 = vmatpush1.bf16.msra.mxu0 0
  %909 = vmatprep.subr.bf16.mxu0 0
  %910 = vmatpush1.bf16.msra.mxu0 0
  %911 = vmatprep.subr.bf16.mxu0 0
  %912 = vmatpush1.bf16.msra.mxu0 0
  %913 = vmatprep.subr.bf16.mxu0 0
  %914 = vmatpush1.bf16.msra.mxu0 0
  %915 = vmatprep.subr.bf16.mxu0 0
  %916 = vmatpush1.bf16.msra.mxu0 0
  %917 = vmatprep.subr.bf16.mxu0 0
  %918 = vmatpush1.bf16.msra.mxu0 0
  %919 = vmatprep.mubr.bf16.mxu0 0
  %920 = vmatmul.mubr.bf16.gmra.mrb[0].mxu0 %v885
  %v921 = vpop.f32.mrb[0].mxu0
  %v922 = vadd.f32 %v857, %v921
  %v923 = vpop.f32.mrb[0].mxu0
  %v924 = vpop.f32.mrb[0].mxu0
  %v925 = vadd.f32 %v857, %v924
  %v926 = vpop.f32.mrb[0].mxu0
  %927 = vdwg.mxu0
  %v928 = vadd.f32 %v755, %v922
  %v929 = vadd.f32 %v756, %v925
  %v930 = vld [vmem:[%s14] sm:$0x1]
  %v931 = vld [vmem:[%s15] sm:$0x1]
  %v932 = vsel %vm64, %v928, 0.0
  %933 = vadd.xlane.f32.xlu0 %v932
  %v934 = vpop.xlane.xlu0 %933
  %v935 = vsel %vm64, %v929, 0.0
  %936 = vadd.xlane.f32.xlu0 %v935
  %v937 = vpop.xlane.xlu0 %936
  %v938 = vmul.f32 %v934, %v71
  %v939 = vmul.f32 %v937, %v71
  %v940 = vsub.f32 %v928, %v938
  %v941 = vsub.f32 %v929, %v939
  %v942 = vmul.f32 %v940, %v940
  %v943 = vmul.f32 %v941, %v941
  %v944 = vsel %vm64, %v942, 0.0
  %945 = vadd.xlane.f32.xlu0 %v944
  %v946 = vpop.xlane.xlu0 %945
  %v947 = vsel %vm64, %v943, 0.0
  %948 = vadd.xlane.f32.xlu0 %v947
  %v949 = vpop.xlane.xlu0 %948
  %v950 = vmul.f32 %v946, %v71
  %v951 = vmul.f32 %v949, %v71
  %v952 = vadd.f32 %v950, 1e-12
  %v953 = vadd.f32 %v951, 1e-12
  %v954 = vrsqrt.pop %v952
  %v955 = vrsqrt.pop %v953
  %v956 = vmul.f32 %v940, %v954
  %v957 = vmul.f32 %v941, %v955
  %v959 = vlaneseq
  %v960 = vshrl.u32 %v959, 7
  %v961 = vsub.s32 0, %v960
  %v962 = vrot.slane %v930, %v961
  %v964 = vmul.f32 %v956, %v962
  %v965 = vmul.f32 %v957, %v962
  %v967 = vlaneseq
  %v968 = vshrl.u32 %v967, 7
  %v969 = vsub.s32 0, %v968
  %v970 = vrot.slane %v931, %v969
  %v972 = vadd.f32 %v964, %v970
  %v973 = vadd.f32 %v965, %v970
  %v974 = vpack.c.bf16 %v973, %v972
  %s975 = scalar_lea.vmem %s4, 16
  %v976 = vld [vmem:[%s975] sm:$0xf]
  %v977 = vld [vmem:[%s975 + $0x4] sm:$0xf]
  %v978 = vld [vmem:[%s975 + $0x8] sm:$0xf]
  %v979 = vld [vmem:[%s975 + $0xc] sm:$0xf]
  %s980 = scalar_lea.vmem %s5, 1
  %v981 = vld [vmem:[%s980] sm:$0x1]
  %v983 = vlaneseq
  %v984 = vshrl.u32 %v983, 7
  %v985 = vsub.s32 0, %v984
  %v986 = vrot.slane %v981, %v985
  %v992 = vunpack.c.l.b16 %v976
  %v993 = vunpack.c.l.b16 %v977
  %v994 = vunpack.c.l.b16 %v978
  %v995 = vunpack.c.l.b16 %v979
  %v996 = vpack.c.b16 %v993, %v992
  %v997 = vpack.c.b16 %v995, %v994
  %v1001 = vsel %vm64, %v974, 0
  %1003 = vmatprep.subr.bf16.mxu0 0
  %1004 = vmatpush1.bf16.msra.mxu0 %v996
  %1005 = vmatprep.subr.bf16.mxu0 0
  %1006 = vmatpush1.bf16.msra.mxu0 %v997
  %1007 = vmatprep.subr.bf16.mxu0 0
  %1008 = vmatpush1.bf16.msra.mxu0 0
  %1009 = vmatprep.subr.bf16.mxu0 0
  %1010 = vmatpush1.bf16.msra.mxu0 0
  %1011 = vmatprep.subr.bf16.mxu0 0
  %1012 = vmatpush1.bf16.msra.mxu0 0
  %1013 = vmatprep.subr.bf16.mxu0 0
  %1014 = vmatpush1.bf16.msra.mxu0 0
  %1015 = vmatprep.subr.bf16.mxu0 0
  %1016 = vmatpush1.bf16.msra.mxu0 0
  %1017 = vmatprep.subr.bf16.mxu0 0
  %1018 = vmatpush1.bf16.msra.mxu0 0
  %1019 = vmatprep.subr.bf16.mxu0 0
  %1020 = vmatpush1.bf16.msra.mxu0 0
  %1021 = vmatprep.subr.bf16.mxu0 0
  %1022 = vmatpush1.bf16.msra.mxu0 0
  %1023 = vmatprep.subr.bf16.mxu0 0
  %1024 = vmatpush1.bf16.msra.mxu0 0
  %1025 = vmatprep.subr.bf16.mxu0 0
  %1026 = vmatpush1.bf16.msra.mxu0 0
  %1027 = vmatprep.subr.bf16.mxu0 0
  %1028 = vmatpush1.bf16.msra.mxu0 0
  %1029 = vmatprep.subr.bf16.mxu0 0
  %1030 = vmatpush1.bf16.msra.mxu0 0
  %1031 = vmatprep.subr.bf16.mxu0 0
  %1032 = vmatpush1.bf16.msra.mxu0 0
  %1033 = vmatprep.subr.bf16.mxu0 0
  %1034 = vmatpush1.bf16.msra.mxu0 0
  %1035 = vmatprep.mubr.bf16.mxu0 0
  %1036 = vmatmul.mubr.bf16.gmra.mrb[0].mxu0 %v1001
  %v1037 = vpop.f32.mrb[0].mxu0
  %v1038 = vadd.f32 %v986, %v1037
  %v1039 = vpop.f32.mrb[0].mxu0
  %v1040 = vpop.f32.mrb[0].mxu0
  %v1041 = vadd.f32 %v986, %v1040
  %v1042 = vpop.f32.mrb[0].mxu0
  %1043 = vdwg.mxu0
  %v1044 = vpack.c.bf16 %v1038, %v1038
  %v1045 = vpack.c.bf16 %v1041, %v1041
  %1047 = vrot.lane.b32.xlu0 %v1044, 96
  %v1048 = vpop.permute.xlu0 %1047
  %v1050 = vsel %vm195, %v1044, 0
  %v1053 = vsel %vm195, %v1048, 0
  %1055 = vmatprep.subr.bf16.mxu0 0
  %1056 = vmatpush1.bf16.xpose.msra.mxu0 %v1053
  %1057 = vmatprep.subr.bf16.mxu0 0
  %1058 = vmatpush1.bf16.xpose.msra.mxu0 0
  %1059 = vmatprep.subr.bf16.mxu0 0
  %1060 = vmatpush1.bf16.xpose.msra.mxu0 0
  %1061 = vmatprep.subr.bf16.mxu0 0
  %1062 = vmatpush1.bf16.xpose.msra.mxu0 0
  %1063 = vmatprep.subr.bf16.mxu0 0
  %1064 = vmatpush1.bf16.xpose.msra.mxu0 0
  %1065 = vmatprep.subr.bf16.mxu0 0
  %1066 = vmatpush1.bf16.xpose.msra.mxu0 0
  %1067 = vmatprep.subr.bf16.mxu0 0
  %1068 = vmatpush1.bf16.xpose.msra.mxu0 0
  %1069 = vmatprep.subr.bf16.mxu0 0
  %1070 = vmatpush1.bf16.xpose.msra.mxu0 0
  %1071 = vmatprep.subr.bf16.mxu0 0
  %1072 = vmatpush1.bf16.xpose.msra.mxu0 0
  %1073 = vmatprep.subr.bf16.mxu0 0
  %1074 = vmatpush1.bf16.xpose.msra.mxu0 0
  %1075 = vmatprep.subr.bf16.mxu0 0
  %1076 = vmatpush1.bf16.xpose.msra.mxu0 0
  %1077 = vmatprep.subr.bf16.mxu0 0
  %1078 = vmatpush1.bf16.xpose.msra.mxu0 0
  %1079 = vmatprep.subr.bf16.mxu0 0
  %1080 = vmatpush1.bf16.xpose.msra.mxu0 0
  %1081 = vmatprep.subr.bf16.mxu0 0
  %1082 = vmatpush1.bf16.xpose.msra.mxu0 0
  %1083 = vmatprep.subr.bf16.mxu0 0
  %1084 = vmatpush1.bf16.xpose.msra.mxu0 0
  %1085 = vmatprep.subr.bf16.mxu0 0
  %1086 = vmatpush1.bf16.xpose.msra.mxu0 0
  %1087 = vmatprep.mubr.bf16.mxu0 0
  %1088 = vmatmul.mubr.bf16.gmra.mrb[0].mxu0 %v1050
  %v1089 = vpop.f32.mrb[0].mxu0
  %v1090 = vadd.f32 %v185, %v1089
  %v1091 = vpop.f32.mrb[0].mxu0
  %v1092 = vpop.f32.mrb[0].mxu0
  %v1093 = vpop.f32.mrb[0].mxu0
  %1094 = vdwg.mxu0
  %1096 = vrot.lane.b32.xlu0 %v1045, 96
  %v1097 = vpop.permute.xlu0 %1096
  %v1099 = vsel %vm195, %v1045, 0
  %v1102 = vsel %vm195, %v1097, 0
  %1104 = vmatprep.subr.bf16.mxu0 0
  %1105 = vmatpush1.bf16.xpose.msra.mxu0 %v1102
  %1106 = vmatprep.subr.bf16.mxu0 0
  %1107 = vmatpush1.bf16.xpose.msra.mxu0 0
  %1108 = vmatprep.subr.bf16.mxu0 0
  %1109 = vmatpush1.bf16.xpose.msra.mxu0 0
  %1110 = vmatprep.subr.bf16.mxu0 0
  %1111 = vmatpush1.bf16.xpose.msra.mxu0 0
  %1112 = vmatprep.subr.bf16.mxu0 0
  %1113 = vmatpush1.bf16.xpose.msra.mxu0 0
  %1114 = vmatprep.subr.bf16.mxu0 0
  %1115 = vmatpush1.bf16.xpose.msra.mxu0 0
  %1116 = vmatprep.subr.bf16.mxu0 0
  %1117 = vmatpush1.bf16.xpose.msra.mxu0 0
  %1118 = vmatprep.subr.bf16.mxu0 0
  %1119 = vmatpush1.bf16.xpose.msra.mxu0 0
  %1120 = vmatprep.subr.bf16.mxu0 0
  %1121 = vmatpush1.bf16.xpose.msra.mxu0 0
  %1122 = vmatprep.subr.bf16.mxu0 0
  %1123 = vmatpush1.bf16.xpose.msra.mxu0 0
  %1124 = vmatprep.subr.bf16.mxu0 0
  %1125 = vmatpush1.bf16.xpose.msra.mxu0 0
  %1126 = vmatprep.subr.bf16.mxu0 0
  %1127 = vmatpush1.bf16.xpose.msra.mxu0 0
  %1128 = vmatprep.subr.bf16.mxu0 0
  %1129 = vmatpush1.bf16.xpose.msra.mxu0 0
  %1130 = vmatprep.subr.bf16.mxu0 0
  %1131 = vmatpush1.bf16.xpose.msra.mxu0 0
  %1132 = vmatprep.subr.bf16.mxu0 0
  %1133 = vmatpush1.bf16.xpose.msra.mxu0 0
  %1134 = vmatprep.subr.bf16.mxu0 0
  %1135 = vmatpush1.bf16.xpose.msra.mxu0 0
  %1136 = vmatprep.mubr.bf16.mxu0 0
  %1137 = vmatmul.mubr.bf16.gmra.mrb[0].mxu0 %v1099
  %v1138 = vpop.f32.mrb[0].mxu0
  %v1139 = vadd.f32 %v189, %v1138
  %v1140 = vpop.f32.mrb[0].mxu0
  %v1141 = vpop.f32.mrb[0].mxu0
  %v1142 = vpop.f32.mrb[0].mxu0
  %1143 = vdwg.mxu0
  %v1144 = vsel %vm291, %v1090, -inf
  %1145 = vmax.xlane.f32.xlu0 %v1144
  %v1146 = vpop.xlane.xlu0 %1145
  %v1147 = vsel %vm291, %v1139, -inf
  %1148 = vmax.xlane.f32.xlu0 %v1147
  %v1149 = vpop.xlane.xlu0 %1148
  %v1150 = vsub.f32 %v1090, %v1146
  %v1151 = vsub.f32 %v1139, %v1149
  %v1152 = vmul.f32 %v1150, 1.442695
  %v1153 = vpow.pop %v1152
  %v1154 = vmul.f32 %v1151, 1.442695
  %v1155 = vpow.pop %v1154
  %v1156 = vsel %vm291, %v1153, 0.0
  %1157 = vadd.xlane.f32.xlu0 %v1156
  %v1158 = vpop.xlane.xlu0 %1157
  %v1159 = vsel %vm291, %v1155, 0.0
  %1160 = vadd.xlane.f32.xlu0 %v1159
  %v1161 = vpop.xlane.xlu0 %1160
  %v1162 = vrcp.pop %v1158
  %v1163 = vrcp.pop %v1161
  %v1164 = vmul.f32 %v1153, %v1162
  %v1165 = vmul.f32 %v1155, %v1163
  %v1166 = vpack.c.bf16 %v1164, %v1164
  %v1167 = vpack.c.bf16 %v1165, %v1165
  %1168 = vrot.lane.b32.xlu0 %v1044, 64
  %v1169 = vpop.permute.xlu0 %1168
  %v1171 = vsel %vm291, %v1166, 0
  %v1174 = vsel %vm321, %v1169, 0
  %1176 = vmatprep.subr.bf16.mxu0 0
  %1177 = vmatpush1.bf16.msra.mxu0 %v1174
  %1178 = vmatprep.subr.bf16.mxu0 0
  %1179 = vmatpush1.bf16.msra.mxu0 0
  %1180 = vmatprep.subr.bf16.mxu0 0
  %1181 = vmatpush1.bf16.msra.mxu0 0
  %1182 = vmatprep.subr.bf16.mxu0 0
  %1183 = vmatpush1.bf16.msra.mxu0 0
  %1184 = vmatprep.subr.bf16.mxu0 0
  %1185 = vmatpush1.bf16.msra.mxu0 0
  %1186 = vmatprep.subr.bf16.mxu0 0
  %1187 = vmatpush1.bf16.msra.mxu0 0
  %1188 = vmatprep.subr.bf16.mxu0 0
  %1189 = vmatpush1.bf16.msra.mxu0 0
  %1190 = vmatprep.subr.bf16.mxu0 0
  %1191 = vmatpush1.bf16.msra.mxu0 0
  %1192 = vmatprep.subr.bf16.mxu0 0
  %1193 = vmatpush1.bf16.msra.mxu0 0
  %1194 = vmatprep.subr.bf16.mxu0 0
  %1195 = vmatpush1.bf16.msra.mxu0 0
  %1196 = vmatprep.subr.bf16.mxu0 0
  %1197 = vmatpush1.bf16.msra.mxu0 0
  %1198 = vmatprep.subr.bf16.mxu0 0
  %1199 = vmatpush1.bf16.msra.mxu0 0
  %1200 = vmatprep.subr.bf16.mxu0 0
  %1201 = vmatpush1.bf16.msra.mxu0 0
  %1202 = vmatprep.subr.bf16.mxu0 0
  %1203 = vmatpush1.bf16.msra.mxu0 0
  %1204 = vmatprep.subr.bf16.mxu0 0
  %1205 = vmatpush1.bf16.msra.mxu0 0
  %1206 = vmatprep.subr.bf16.mxu0 0
  %1207 = vmatpush1.bf16.msra.mxu0 0
  %1208 = vmatprep.mubr.bf16.mxu0 0
  %1209 = vmatmul.mubr.bf16.gmra.mrb[0].mxu0 %v1171
  %v1210 = vpop.f32.mrb[0].mxu0
  %v1211 = vadd.f32 0.0, %v1210
  %v1212 = vpop.f32.mrb[0].mxu0
  %v1213 = vpop.f32.mrb[0].mxu0
  %v1214 = vpop.f32.mrb[0].mxu0
  %1215 = vdwg.mxu0
  %1216 = vrot.lane.b32.xlu0 %v1045, 64
  %v1217 = vpop.permute.xlu0 %1216
  %v1219 = vsel %vm291, %v1167, 0
  %v1222 = vsel %vm321, %v1217, 0
  %1224 = vmatprep.subr.bf16.mxu0 0
  %1225 = vmatpush1.bf16.msra.mxu0 %v1222
  %1226 = vmatprep.subr.bf16.mxu0 0
  %1227 = vmatpush1.bf16.msra.mxu0 0
  %1228 = vmatprep.subr.bf16.mxu0 0
  %1229 = vmatpush1.bf16.msra.mxu0 0
  %1230 = vmatprep.subr.bf16.mxu0 0
  %1231 = vmatpush1.bf16.msra.mxu0 0
  %1232 = vmatprep.subr.bf16.mxu0 0
  %1233 = vmatpush1.bf16.msra.mxu0 0
  %1234 = vmatprep.subr.bf16.mxu0 0
  %1235 = vmatpush1.bf16.msra.mxu0 0
  %1236 = vmatprep.subr.bf16.mxu0 0
  %1237 = vmatpush1.bf16.msra.mxu0 0
  %1238 = vmatprep.subr.bf16.mxu0 0
  %1239 = vmatpush1.bf16.msra.mxu0 0
  %1240 = vmatprep.subr.bf16.mxu0 0
  %1241 = vmatpush1.bf16.msra.mxu0 0
  %1242 = vmatprep.subr.bf16.mxu0 0
  %1243 = vmatpush1.bf16.msra.mxu0 0
  %1244 = vmatprep.subr.bf16.mxu0 0
  %1245 = vmatpush1.bf16.msra.mxu0 0
  %1246 = vmatprep.subr.bf16.mxu0 0
  %1247 = vmatpush1.bf16.msra.mxu0 0
  %1248 = vmatprep.subr.bf16.mxu0 0
  %1249 = vmatpush1.bf16.msra.mxu0 0
  %1250 = vmatprep.subr.bf16.mxu0 0
  %1251 = vmatpush1.bf16.msra.mxu0 0
  %1252 = vmatprep.subr.bf16.mxu0 0
  %1253 = vmatpush1.bf16.msra.mxu0 0
  %1254 = vmatprep.subr.bf16.mxu0 0
  %1255 = vmatpush1.bf16.msra.mxu0 0
  %1256 = vmatprep.mubr.bf16.mxu0 0
  %1257 = vmatmul.mubr.bf16.gmra.mrb[0].mxu0 %v1219
  %v1258 = vpop.f32.mrb[0].mxu0
  %v1259 = vadd.f32 0.0, %v1258
  %v1260 = vpop.f32.mrb[0].mxu0
  %v1261 = vpop.f32.mrb[0].mxu0
  %v1262 = vpop.f32.mrb[0].mxu0
  %1263 = vdwg.mxu0
  %1264 = vrot.lane.b32.xlu0 %v1044, 112
  %v1265 = vpop.permute.xlu0 %1264
  %1266 = vrot.lane.b32.xlu0 %v1044, 80
  %v1267 = vpop.permute.xlu0 %1266
  %v1269 = vsel %vm195, %v1265, 0
  %v1272 = vsel %vm195, %v1267, 0
  %1274 = vmatprep.subr.bf16.mxu0 0
  %1275 = vmatpush1.bf16.xpose.msra.mxu0 %v1272
  %1276 = vmatprep.subr.bf16.mxu0 0
  %1277 = vmatpush1.bf16.xpose.msra.mxu0 0
  %1278 = vmatprep.subr.bf16.mxu0 0
  %1279 = vmatpush1.bf16.xpose.msra.mxu0 0
  %1280 = vmatprep.subr.bf16.mxu0 0
  %1281 = vmatpush1.bf16.xpose.msra.mxu0 0
  %1282 = vmatprep.subr.bf16.mxu0 0
  %1283 = vmatpush1.bf16.xpose.msra.mxu0 0
  %1284 = vmatprep.subr.bf16.mxu0 0
  %1285 = vmatpush1.bf16.xpose.msra.mxu0 0
  %1286 = vmatprep.subr.bf16.mxu0 0
  %1287 = vmatpush1.bf16.xpose.msra.mxu0 0
  %1288 = vmatprep.subr.bf16.mxu0 0
  %1289 = vmatpush1.bf16.xpose.msra.mxu0 0
  %1290 = vmatprep.subr.bf16.mxu0 0
  %1291 = vmatpush1.bf16.xpose.msra.mxu0 0
  %1292 = vmatprep.subr.bf16.mxu0 0
  %1293 = vmatpush1.bf16.xpose.msra.mxu0 0
  %1294 = vmatprep.subr.bf16.mxu0 0
  %1295 = vmatpush1.bf16.xpose.msra.mxu0 0
  %1296 = vmatprep.subr.bf16.mxu0 0
  %1297 = vmatpush1.bf16.xpose.msra.mxu0 0
  %1298 = vmatprep.subr.bf16.mxu0 0
  %1299 = vmatpush1.bf16.xpose.msra.mxu0 0
  %1300 = vmatprep.subr.bf16.mxu0 0
  %1301 = vmatpush1.bf16.xpose.msra.mxu0 0
  %1302 = vmatprep.subr.bf16.mxu0 0
  %1303 = vmatpush1.bf16.xpose.msra.mxu0 0
  %1304 = vmatprep.subr.bf16.mxu0 0
  %1305 = vmatpush1.bf16.xpose.msra.mxu0 0
  %1306 = vmatprep.mubr.bf16.mxu0 0
  %1307 = vmatmul.mubr.bf16.gmra.mrb[0].mxu0 %v1269
  %v1308 = vpop.f32.mrb[0].mxu0
  %v1309 = vadd.f32 %v185, %v1308
  %v1310 = vpop.f32.mrb[0].mxu0
  %v1311 = vpop.f32.mrb[0].mxu0
  %v1312 = vpop.f32.mrb[0].mxu0
  %1313 = vdwg.mxu0
  %1314 = vrot.lane.b32.xlu0 %v1045, 112
  %v1315 = vpop.permute.xlu0 %1314
  %1316 = vrot.lane.b32.xlu0 %v1045, 80
  %v1317 = vpop.permute.xlu0 %1316
  %v1319 = vsel %vm195, %v1315, 0
  %v1322 = vsel %vm195, %v1317, 0
  %1324 = vmatprep.subr.bf16.mxu0 0
  %1325 = vmatpush1.bf16.xpose.msra.mxu0 %v1322
  %1326 = vmatprep.subr.bf16.mxu0 0
  %1327 = vmatpush1.bf16.xpose.msra.mxu0 0
  %1328 = vmatprep.subr.bf16.mxu0 0
  %1329 = vmatpush1.bf16.xpose.msra.mxu0 0
  %1330 = vmatprep.subr.bf16.mxu0 0
  %1331 = vmatpush1.bf16.xpose.msra.mxu0 0
  %1332 = vmatprep.subr.bf16.mxu0 0
  %1333 = vmatpush1.bf16.xpose.msra.mxu0 0
  %1334 = vmatprep.subr.bf16.mxu0 0
  %1335 = vmatpush1.bf16.xpose.msra.mxu0 0
  %1336 = vmatprep.subr.bf16.mxu0 0
  %1337 = vmatpush1.bf16.xpose.msra.mxu0 0
  %1338 = vmatprep.subr.bf16.mxu0 0
  %1339 = vmatpush1.bf16.xpose.msra.mxu0 0
  %1340 = vmatprep.subr.bf16.mxu0 0
  %1341 = vmatpush1.bf16.xpose.msra.mxu0 0
  %1342 = vmatprep.subr.bf16.mxu0 0
  %1343 = vmatpush1.bf16.xpose.msra.mxu0 0
  %1344 = vmatprep.subr.bf16.mxu0 0
  %1345 = vmatpush1.bf16.xpose.msra.mxu0 0
  %1346 = vmatprep.subr.bf16.mxu0 0
  %1347 = vmatpush1.bf16.xpose.msra.mxu0 0
  %1348 = vmatprep.subr.bf16.mxu0 0
  %1349 = vmatpush1.bf16.xpose.msra.mxu0 0
  %1350 = vmatprep.subr.bf16.mxu0 0
  %1351 = vmatpush1.bf16.xpose.msra.mxu0 0
  %1352 = vmatprep.subr.bf16.mxu0 0
  %1353 = vmatpush1.bf16.xpose.msra.mxu0 0
  %1354 = vmatprep.subr.bf16.mxu0 0
  %1355 = vmatpush1.bf16.xpose.msra.mxu0 0
  %1356 = vmatprep.mubr.bf16.mxu0 0
  %1357 = vmatmul.mubr.bf16.gmra.mrb[0].mxu0 %v1319
  %v1358 = vpop.f32.mrb[0].mxu0
  %v1359 = vadd.f32 %v189, %v1358
  %v1360 = vpop.f32.mrb[0].mxu0
  %v1361 = vpop.f32.mrb[0].mxu0
  %v1362 = vpop.f32.mrb[0].mxu0
  %1363 = vdwg.mxu0
  %v1364 = vsel %vm291, %v1309, -inf
  %1365 = vmax.xlane.f32.xlu0 %v1364
  %v1366 = vpop.xlane.xlu0 %1365
  %v1367 = vsel %vm291, %v1359, -inf
  %1368 = vmax.xlane.f32.xlu0 %v1367
  %v1369 = vpop.xlane.xlu0 %1368
  %v1370 = vsub.f32 %v1309, %v1366
  %v1371 = vsub.f32 %v1359, %v1369
  %v1372 = vmul.f32 %v1370, 1.442695
  %v1373 = vpow.pop %v1372
  %v1374 = vmul.f32 %v1371, 1.442695
  %v1375 = vpow.pop %v1374
  %v1376 = vsel %vm291, %v1373, 0.0
  %1377 = vadd.xlane.f32.xlu0 %v1376
  %v1378 = vpop.xlane.xlu0 %1377
  %v1379 = vsel %vm291, %v1375, 0.0
  %1380 = vadd.xlane.f32.xlu0 %v1379
  %v1381 = vpop.xlane.xlu0 %1380
  %v1382 = vrcp.pop %v1378
  %v1383 = vrcp.pop %v1381
  %v1384 = vmul.f32 %v1373, %v1382
  %v1385 = vmul.f32 %v1375, %v1383
  %v1386 = vpack.c.bf16 %v1384, %v1384
  %v1387 = vpack.c.bf16 %v1385, %v1385
  %1388 = vrot.lane.b32.xlu0 %v1044, 48
  %v1389 = vpop.permute.xlu0 %1388
  %v1391 = vsel %vm291, %v1386, 0
  %v1394 = vsel %vm321, %v1389, 0
  %1396 = vmatprep.subr.bf16.mxu0 0
  %1397 = vmatpush1.bf16.msra.mxu0 %v1394
  %1398 = vmatprep.subr.bf16.mxu0 0
  %1399 = vmatpush1.bf16.msra.mxu0 0
  %1400 = vmatprep.subr.bf16.mxu0 0
  %1401 = vmatpush1.bf16.msra.mxu0 0
  %1402 = vmatprep.subr.bf16.mxu0 0
  %1403 = vmatpush1.bf16.msra.mxu0 0
  %1404 = vmatprep.subr.bf16.mxu0 0
  %1405 = vmatpush1.bf16.msra.mxu0 0
  %1406 = vmatprep.subr.bf16.mxu0 0
  %1407 = vmatpush1.bf16.msra.mxu0 0
  %1408 = vmatprep.subr.bf16.mxu0 0
  %1409 = vmatpush1.bf16.msra.mxu0 0
  %1410 = vmatprep.subr.bf16.mxu0 0
  %1411 = vmatpush1.bf16.msra.mxu0 0
  %1412 = vmatprep.subr.bf16.mxu0 0
  %1413 = vmatpush1.bf16.msra.mxu0 0
  %1414 = vmatprep.subr.bf16.mxu0 0
  %1415 = vmatpush1.bf16.msra.mxu0 0
  %1416 = vmatprep.subr.bf16.mxu0 0
  %1417 = vmatpush1.bf16.msra.mxu0 0
  %1418 = vmatprep.subr.bf16.mxu0 0
  %1419 = vmatpush1.bf16.msra.mxu0 0
  %1420 = vmatprep.subr.bf16.mxu0 0
  %1421 = vmatpush1.bf16.msra.mxu0 0
  %1422 = vmatprep.subr.bf16.mxu0 0
  %1423 = vmatpush1.bf16.msra.mxu0 0
  %1424 = vmatprep.subr.bf16.mxu0 0
  %1425 = vmatpush1.bf16.msra.mxu0 0
  %1426 = vmatprep.subr.bf16.mxu0 0
  %1427 = vmatpush1.bf16.msra.mxu0 0
  %1428 = vmatprep.mubr.bf16.mxu0 0
  %1429 = vmatmul.mubr.bf16.gmra.mrb[0].mxu0 %v1391
  %v1430 = vpop.f32.mrb[0].mxu0
  %v1431 = vadd.f32 0.0, %v1430
  %v1432 = vpop.f32.mrb[0].mxu0
  %v1433 = vpop.f32.mrb[0].mxu0
  %v1434 = vpop.f32.mrb[0].mxu0
  %1435 = vdwg.mxu0
  %1436 = vrot.lane.b32.xlu0 %v1045, 48
  %v1437 = vpop.permute.xlu0 %1436
  %v1439 = vsel %vm291, %v1387, 0
  %v1442 = vsel %vm321, %v1437, 0
  %1444 = vmatprep.subr.bf16.mxu0 0
  %1445 = vmatpush1.bf16.msra.mxu0 %v1442
  %1446 = vmatprep.subr.bf16.mxu0 0
  %1447 = vmatpush1.bf16.msra.mxu0 0
  %1448 = vmatprep.subr.bf16.mxu0 0
  %1449 = vmatpush1.bf16.msra.mxu0 0
  %1450 = vmatprep.subr.bf16.mxu0 0
  %1451 = vmatpush1.bf16.msra.mxu0 0
  %1452 = vmatprep.subr.bf16.mxu0 0
  %1453 = vmatpush1.bf16.msra.mxu0 0
  %1454 = vmatprep.subr.bf16.mxu0 0
  %1455 = vmatpush1.bf16.msra.mxu0 0
  %1456 = vmatprep.subr.bf16.mxu0 0
  %1457 = vmatpush1.bf16.msra.mxu0 0
  %1458 = vmatprep.subr.bf16.mxu0 0
  %1459 = vmatpush1.bf16.msra.mxu0 0
  %1460 = vmatprep.subr.bf16.mxu0 0
  %1461 = vmatpush1.bf16.msra.mxu0 0
  %1462 = vmatprep.subr.bf16.mxu0 0
  %1463 = vmatpush1.bf16.msra.mxu0 0
  %1464 = vmatprep.subr.bf16.mxu0 0
  %1465 = vmatpush1.bf16.msra.mxu0 0
  %1466 = vmatprep.subr.bf16.mxu0 0
  %1467 = vmatpush1.bf16.msra.mxu0 0
  %1468 = vmatprep.subr.bf16.mxu0 0
  %1469 = vmatpush1.bf16.msra.mxu0 0
  %1470 = vmatprep.subr.bf16.mxu0 0
  %1471 = vmatpush1.bf16.msra.mxu0 0
  %1472 = vmatprep.subr.bf16.mxu0 0
  %1473 = vmatpush1.bf16.msra.mxu0 0
  %1474 = vmatprep.subr.bf16.mxu0 0
  %1475 = vmatpush1.bf16.msra.mxu0 0
  %1476 = vmatprep.mubr.bf16.mxu0 0
  %1477 = vmatmul.mubr.bf16.gmra.mrb[0].mxu0 %v1439
  %v1478 = vpop.f32.mrb[0].mxu0
  %v1479 = vadd.f32 0.0, %v1478
  %v1480 = vpop.f32.mrb[0].mxu0
  %v1481 = vpop.f32.mrb[0].mxu0
  %v1482 = vpop.f32.mrb[0].mxu0
  %1483 = vdwg.mxu0
  %1486 = vrot.lane.b32.xlu0 %v1431, 16
  %v1487 = vpop.permute.xlu0 %1486
  %1488 = vrot.lane.b32.xlu0 %v1479, 16
  %v1489 = vpop.permute.xlu0 %1488
  %v1492 = vsel %vm195, %v1211, %v1487
  %v1493 = vsel %vm195, %v1259, %v1489
  %v1494 = vpack.c.bf16 %v1493, %v1492
  %s1495 = scalar_lea.vmem %s6, 16
  %v1496 = vld [vmem:[%s1495] sm:$0xf]
  %v1497 = vld [vmem:[%s1495 + $0x4] sm:$0xf]
  %v1498 = vld [vmem:[%s1495 + $0x8] sm:$0xf]
  %v1499 = vld [vmem:[%s1495 + $0xc] sm:$0xf]
  %s1500 = scalar_lea.vmem %s7, 1
  %v1501 = vld [vmem:[%s1500] sm:$0x1]
  %v1503 = vlaneseq
  %v1504 = vshrl.u32 %v1503, 7
  %v1505 = vsub.s32 0, %v1504
  %v1506 = vrot.slane %v1501, %v1505
  %v1512 = vunpack.c.l.b16 %v1496
  %v1513 = vunpack.c.l.b16 %v1497
  %v1514 = vunpack.c.l.b16 %v1498
  %v1515 = vunpack.c.l.b16 %v1499
  %v1516 = vpack.c.b16 %v1513, %v1512
  %v1517 = vpack.c.b16 %v1515, %v1514
  %v1521 = vsel %vm64, %v1494, 0
  %1523 = vmatprep.subr.bf16.mxu0 0
  %1524 = vmatpush1.bf16.msra.mxu0 %v1516
  %1525 = vmatprep.subr.bf16.mxu0 0
  %1526 = vmatpush1.bf16.msra.mxu0 %v1517
  %1527 = vmatprep.subr.bf16.mxu0 0
  %1528 = vmatpush1.bf16.msra.mxu0 0
  %1529 = vmatprep.subr.bf16.mxu0 0
  %1530 = vmatpush1.bf16.msra.mxu0 0
  %1531 = vmatprep.subr.bf16.mxu0 0
  %1532 = vmatpush1.bf16.msra.mxu0 0
  %1533 = vmatprep.subr.bf16.mxu0 0
  %1534 = vmatpush1.bf16.msra.mxu0 0
  %1535 = vmatprep.subr.bf16.mxu0 0
  %1536 = vmatpush1.bf16.msra.mxu0 0
  %1537 = vmatprep.subr.bf16.mxu0 0
  %1538 = vmatpush1.bf16.msra.mxu0 0
  %1539 = vmatprep.subr.bf16.mxu0 0
  %1540 = vmatpush1.bf16.msra.mxu0 0
  %1541 = vmatprep.subr.bf16.mxu0 0
  %1542 = vmatpush1.bf16.msra.mxu0 0
  %1543 = vmatprep.subr.bf16.mxu0 0
  %1544 = vmatpush1.bf16.msra.mxu0 0
  %1545 = vmatprep.subr.bf16.mxu0 0
  %1546 = vmatpush1.bf16.msra.mxu0 0
  %1547 = vmatprep.subr.bf16.mxu0 0
  %1548 = vmatpush1.bf16.msra.mxu0 0
  %1549 = vmatprep.subr.bf16.mxu0 0
  %1550 = vmatpush1.bf16.msra.mxu0 0
  %1551 = vmatprep.subr.bf16.mxu0 0
  %1552 = vmatpush1.bf16.msra.mxu0 0
  %1553 = vmatprep.subr.bf16.mxu0 0
  %1554 = vmatpush1.bf16.msra.mxu0 0
  %1555 = vmatprep.mubr.bf16.mxu0 0
  %1556 = vmatmul.mubr.bf16.gmra.mrb[0].mxu0 %v1521
  %v1557 = vpop.f32.mrb[0].mxu0
  %v1558 = vadd.f32 %v1506, %v1557
  %v1559 = vpop.f32.mrb[0].mxu0
  %v1560 = vpop.f32.mrb[0].mxu0
  %v1561 = vadd.f32 %v1506, %v1560
  %v1562 = vpop.f32.mrb[0].mxu0
  %1563 = vdwg.mxu0
  %v1564 = vadd.f32 %v972, %v1558
  %v1565 = vadd.f32 %v973, %v1561
  %s1566 = scalar_lea.vmem %s8, 1
  %v1567 = vld [vmem:[%s1566] sm:$0x1]
  %s1568 = scalar_lea.vmem %s9, 1
  %v1569 = vld [vmem:[%s1568] sm:$0x1]
  %v1570 = vsel %vm64, %v1564, 0.0
  %1571 = vadd.xlane.f32.xlu0 %v1570
  %v1572 = vpop.xlane.xlu0 %1571
  %v1573 = vsel %vm64, %v1565, 0.0
  %1574 = vadd.xlane.f32.xlu0 %v1573
  %v1575 = vpop.xlane.xlu0 %1574
  %v1576 = vmul.f32 %v1572, %v71
  %v1577 = vmul.f32 %v1575, %v71
  %v1578 = vsub.f32 %v1564, %v1576
  %v1579 = vsub.f32 %v1565, %v1577
  %v1580 = vmul.f32 %v1578, %v1578
  %v1581 = vmul.f32 %v1579, %v1579
  %v1582 = vsel %vm64, %v1580, 0.0
  %1583 = vadd.xlane.f32.xlu0 %v1582
  %v1584 = vpop.xlane.xlu0 %1583
  %v1585 = vsel %vm64, %v1581, 0.0
  %1586 = vadd.xlane.f32.xlu0 %v1585
  %v1587 = vpop.xlane.xlu0 %1586
  %v1588 = vmul.f32 %v1584, %v71
  %v1589 = vmul.f32 %v1587, %v71
  %v1590 = vadd.f32 %v1588, 1e-12
  %v1591 = vadd.f32 %v1589, 1e-12
  %v1592 = vrsqrt.pop %v1590
  %v1593 = vrsqrt.pop %v1591
  %v1594 = vmul.f32 %v1578, %v1592
  %v1595 = vmul.f32 %v1579, %v1593
  %v1597 = vlaneseq
  %v1598 = vshrl.u32 %v1597, 7
  %v1599 = vsub.s32 0, %v1598
  %v1600 = vrot.slane %v1567, %v1599
  %v1602 = vmul.f32 %v1594, %v1600
  %v1603 = vmul.f32 %v1595, %v1600
  %v1605 = vlaneseq
  %v1606 = vshrl.u32 %v1605, 7
  %v1607 = vsub.s32 0, %v1606
  %v1608 = vrot.slane %v1569, %v1607
  %v1610 = vadd.f32 %v1602, %v1608
  %v1611 = vadd.f32 %v1603, %v1608
  %v1612 = vpack.c.bf16 %v1611, %v1610
  %s1613 = scalar_lea.vmem %s10, 16
  %v1614 = vld [vmem:[%s1613] sm:$0xf]
  %v1615 = vld [vmem:[%s1613 + $0x4] sm:$0xf]
  %v1616 = vld [vmem:[%s1613 + $0x8] sm:$0xf]
  %v1617 = vld [vmem:[%s1613 + $0xc] sm:$0xf]
  %s1618 = scalar_lea.vmem %s11, 1
  %v1619 = vld [vmem:[%s1618] sm:$0x1]
  %v1621 = vlaneseq
  %v1622 = vshrl.u32 %v1621, 7
  %v1623 = vsub.s32 0, %v1622
  %v1624 = vrot.slane %v1619, %v1623
  %v1630 = vunpack.c.l.b16 %v1614
  %v1631 = vunpack.c.l.b16 %v1615
  %v1632 = vunpack.c.l.b16 %v1616
  %v1633 = vunpack.c.l.b16 %v1617
  %v1634 = vpack.c.b16 %v1631, %v1630
  %v1635 = vpack.c.b16 %v1633, %v1632
  %v1639 = vsel %vm64, %v1612, 0
  %1641 = vmatprep.subr.bf16.mxu0 0
  %1642 = vmatpush1.bf16.msra.mxu0 %v1634
  %1643 = vmatprep.subr.bf16.mxu0 0
  %1644 = vmatpush1.bf16.msra.mxu0 %v1635
  %1645 = vmatprep.subr.bf16.mxu0 0
  %1646 = vmatpush1.bf16.msra.mxu0 0
  %1647 = vmatprep.subr.bf16.mxu0 0
  %1648 = vmatpush1.bf16.msra.mxu0 0
  %1649 = vmatprep.subr.bf16.mxu0 0
  %1650 = vmatpush1.bf16.msra.mxu0 0
  %1651 = vmatprep.subr.bf16.mxu0 0
  %1652 = vmatpush1.bf16.msra.mxu0 0
  %1653 = vmatprep.subr.bf16.mxu0 0
  %1654 = vmatpush1.bf16.msra.mxu0 0
  %1655 = vmatprep.subr.bf16.mxu0 0
  %1656 = vmatpush1.bf16.msra.mxu0 0
  %1657 = vmatprep.subr.bf16.mxu0 0
  %1658 = vmatpush1.bf16.msra.mxu0 0
  %1659 = vmatprep.subr.bf16.mxu0 0
  %1660 = vmatpush1.bf16.msra.mxu0 0
  %1661 = vmatprep.subr.bf16.mxu0 0
  %1662 = vmatpush1.bf16.msra.mxu0 0
  %1663 = vmatprep.subr.bf16.mxu0 0
  %1664 = vmatpush1.bf16.msra.mxu0 0
  %1665 = vmatprep.subr.bf16.mxu0 0
  %1666 = vmatpush1.bf16.msra.mxu0 0
  %1667 = vmatprep.subr.bf16.mxu0 0
  %1668 = vmatpush1.bf16.msra.mxu0 0
  %1669 = vmatprep.subr.bf16.mxu0 0
  %1670 = vmatpush1.bf16.msra.mxu0 0
  %1671 = vmatprep.subr.bf16.mxu0 0
  %1672 = vmatpush1.bf16.msra.mxu0 0
  %1673 = vmatprep.mubr.bf16.mxu0 0
  %1674 = vmatmul.mubr.bf16.gmra.mrb[0].mxu0 %v1639
  %v1675 = vpop.f32.mrb[0].mxu0
  %v1676 = vadd.f32 %v1624, %v1675
  %v1677 = vpop.f32.mrb[0].mxu0
  %v1678 = vpop.f32.mrb[0].mxu0
  %v1679 = vadd.f32 %v1624, %v1678
  %v1680 = vpop.f32.mrb[0].mxu0
  %1681 = vdwg.mxu0
  %v1682 = vmul.f32 %v1676, %v1676
  %v1683 = vmul.f32 %v1679, %v1679
  %v1684 = vmul.f32 %v1676, %v1682
  %v1685 = vmul.f32 %v1679, %v1683
  %v1686 = vmul.f32 %v1684, 0.044715
  %v1687 = vmul.f32 %v1685, 0.044715
  %v1688 = vadd.f32 %v1676, %v1686
  %v1689 = vadd.f32 %v1679, %v1687
  %v1690 = vmul.f32 %v1688, 0.7978846
  %v1691 = vmul.f32 %v1689, 0.7978846
  %v1692 = vtanh.pop %v1690
  %v1693 = vtanh.pop %v1691
  %v1694 = vadd.f32 %v1692, 1.0
  %v1695 = vadd.f32 %v1693, 1.0
  %v1696 = vmul.f32 %v1694, 0.5
  %v1697 = vmul.f32 %v1695, 0.5
  %v1698 = vmul.f32 %v1676, %v1696
  %v1699 = vmul.f32 %v1679, %v1697
  %v1700 = vpack.c.bf16 %v1699, %v1698
  %s1701 = scalar_lea.vmem %s12, 32
  %v1702 = vld [vmem:[%s1701] sm:$0xf]
  %v1703 = vld [vmem:[%s1701 + $0x4] sm:$0xf]
  %v1704 = vld [vmem:[%s1701 + $0x8] sm:$0xf]
  %v1705 = vld [vmem:[%s1701 + $0xc] sm:$0xf]
  %v1706 = vld [vmem:[%s1701 + $0x10] sm:$0xf]
  %v1707 = vld [vmem:[%s1701 + $0x14] sm:$0xf]
  %v1708 = vld [vmem:[%s1701 + $0x18] sm:$0xf]
  %v1709 = vld [vmem:[%s1701 + $0x1c] sm:$0xf]
  %s1710 = scalar_lea.vmem %s13, 1
  %v1711 = vld [vmem:[%s1710] sm:$0x1]
  %v1713 = vlaneseq
  %v1714 = vshrl.u32 %v1713, 7
  %v1715 = vsub.s32 0, %v1714
  %v1716 = vrot.slane %v1711, %v1715
  %v1726 = vunpack.c.l.b16 %v1702
  %v1727 = vunpack.c.l.b16 %v1703
  %v1728 = vunpack.c.l.b16 %v1704
  %v1729 = vunpack.c.l.b16 %v1705
  %v1730 = vunpack.c.l.b16 %v1706
  %v1731 = vunpack.c.l.b16 %v1707
  %v1732 = vunpack.c.l.b16 %v1708
  %v1733 = vunpack.c.l.b16 %v1709
  %v1734 = vpack.c.b16 %v1727, %v1726
  %v1735 = vpack.c.b16 %v1729, %v1728
  %v1736 = vpack.c.b16 %v1731, %v1730
  %v1737 = vpack.c.b16 %v1733, %v1732
  %v1743 = vsel %vm883, %v1700, 0
  %1745 = vmatprep.subr.bf16.mxu0 0
  %1746 = vmatpush1.bf16.msra.mxu0 %v1734
  %1747 = vmatprep.subr.bf16.mxu0 0
  %1748 = vmatpush1.bf16.msra.mxu0 %v1735
  %1749 = vmatprep.subr.bf16.mxu0 0
  %1750 = vmatpush1.bf16.msra.mxu0 %v1736
  %1751 = vmatprep.subr.bf16.mxu0 0
  %1752 = vmatpush1.bf16.msra.mxu0 %v1737
  %1753 = vmatprep.subr.bf16.mxu0 0
  %1754 = vmatpush1.bf16.msra.mxu0 0
  %1755 = vmatprep.subr.bf16.mxu0 0
  %1756 = vmatpush1.bf16.msra.mxu0 0
  %1757 = vmatprep.subr.bf16.mxu0 0
  %1758 = vmatpush1.bf16.msra.mxu0 0
  %1759 = vmatprep.subr.bf16.mxu0 0
  %1760 = vmatpush1.bf16.msra.mxu0 0
  %1761 = vmatprep.subr.bf16.mxu0 0
  %1762 = vmatpush1.bf16.msra.mxu0 0
  %1763 = vmatprep.subr.bf16.mxu0 0
  %1764 = vmatpush1.bf16.msra.mxu0 0
  %1765 = vmatprep.subr.bf16.mxu0 0
  %1766 = vmatpush1.bf16.msra.mxu0 0
  %1767 = vmatprep.subr.bf16.mxu0 0
  %1768 = vmatpush1.bf16.msra.mxu0 0
  %1769 = vmatprep.subr.bf16.mxu0 0
  %1770 = vmatpush1.bf16.msra.mxu0 0
  %1771 = vmatprep.subr.bf16.mxu0 0
  %1772 = vmatpush1.bf16.msra.mxu0 0
  %1773 = vmatprep.subr.bf16.mxu0 0
  %1774 = vmatpush1.bf16.msra.mxu0 0
  %1775 = vmatprep.subr.bf16.mxu0 0
  %1776 = vmatpush1.bf16.msra.mxu0 0
  %1777 = vmatprep.mubr.bf16.mxu0 0
  %1778 = vmatmul.mubr.bf16.gmra.mrb[0].mxu0 %v1743
  %v1779 = vpop.f32.mrb[0].mxu0
  %v1780 = vadd.f32 %v1716, %v1779
  %v1781 = vpop.f32.mrb[0].mxu0
  %v1782 = vpop.f32.mrb[0].mxu0
  %v1783 = vadd.f32 %v1716, %v1782
  %v1784 = vpop.f32.mrb[0].mxu0
  %1785 = vdwg.mxu0
  %v1786 = vadd.f32 %v1610, %v1780
  %v1787 = vadd.f32 %v1611, %v1783
  %s1788 = scalar_lea.vmem %s14, 1
  %v1789 = vld [vmem:[%s1788] sm:$0x1]
  %s1790 = scalar_lea.vmem %s15, 1
  %v1791 = vld [vmem:[%s1790] sm:$0x1]
  %v1792 = vsel %vm64, %v1786, 0.0
  %1793 = vadd.xlane.f32.xlu0 %v1792
  %v1794 = vpop.xlane.xlu0 %1793
  %v1795 = vsel %vm64, %v1787, 0.0
  %1796 = vadd.xlane.f32.xlu0 %v1795
  %v1797 = vpop.xlane.xlu0 %1796
  %v1798 = vmul.f32 %v1794, %v71
  %v1799 = vmul.f32 %v1797, %v71
  %v1800 = vsub.f32 %v1786, %v1798
  %v1801 = vsub.f32 %v1787, %v1799
  %v1802 = vmul.f32 %v1800, %v1800
  %v1803 = vmul.f32 %v1801, %v1801
  %v1804 = vsel %vm64, %v1802, 0.0
  %1805 = vadd.xlane.f32.xlu0 %v1804
  %v1806 = vpop.xlane.xlu0 %1805
  %v1807 = vsel %vm64, %v1803, 0.0
  %1808 = vadd.xlane.f32.xlu0 %v1807
  %v1809 = vpop.xlane.xlu0 %1808
  %v1810 = vmul.f32 %v1806, %v71
  %v1811 = vmul.f32 %v1809, %v71
  %v1812 = vadd.f32 %v1810, 1e-12
  %v1813 = vadd.f32 %v1811, 1e-12
  %v1814 = vrsqrt.pop %v1812
  %v1815 = vrsqrt.pop %v1813
  %v1816 = vmul.f32 %v1800, %v1814
  %v1817 = vmul.f32 %v1801, %v1815
  %v1819 = vlaneseq
  %v1820 = vshrl.u32 %v1819, 7
  %v1821 = vsub.s32 0, %v1820
  %v1822 = vrot.slane %v1789, %v1821
  %v1824 = vmul.f32 %v1816, %v1822
  %v1825 = vmul.f32 %v1817, %v1822
  %v1827 = vlaneseq
  %v1828 = vshrl.u32 %v1827, 7
  %v1829 = vsub.s32 0, %v1828
  %v1830 = vrot.slane %v1791, %v1829
  %v1832 = vadd.f32 %v1824, %v1830
  %v1833 = vadd.f32 %v1825, %v1830
  %v1834 = vpack.c.bf16 %v1833, %v1832
  %v1835 = vld [vmem:[%s16] sm:$0xf]
  %v1836 = vld [vmem:[%s16 + $0x4] sm:$0xf]
  %v1837 = vld [vmem:[%s16 + $0x8] sm:$0xf]
  %v1838 = vld [vmem:[%s16 + $0xc] sm:$0xf]
  %v1839 = vld [vmem:[%s17] sm:$0x1]
  %v1841 = vlaneseq
  %v1842 = vshrl.u32 %v1841, 7
  %v1843 = vsub.s32 0, %v1842
  %v1844 = vrot.slane %v1839, %v1843
  %v1850 = vunpack.c.l.b16 %v1835
  %v1851 = vunpack.c.l.b16 %v1836
  %v1852 = vunpack.c.l.b16 %v1837
  %v1853 = vunpack.c.l.b16 %v1838
  %v1854 = vpack.c.b16 %v1851, %v1850
  %v1855 = vpack.c.b16 %v1853, %v1852
  %v1859 = vsel %vm64, %v1834, 0
  %1861 = vmatprep.subr.bf16.mxu0 0
  %1862 = vmatpush1.bf16.msra.mxu0 %v1854
  %1863 = vmatprep.subr.bf16.mxu0 0
  %1864 = vmatpush1.bf16.msra.mxu0 %v1855
  %1865 = vmatprep.subr.bf16.mxu0 0
  %1866 = vmatpush1.bf16.msra.mxu0 0
  %1867 = vmatprep.subr.bf16.mxu0 0
  %1868 = vmatpush1.bf16.msra.mxu0 0
  %1869 = vmatprep.subr.bf16.mxu0 0
  %1870 = vmatpush1.bf16.msra.mxu0 0
  %1871 = vmatprep.subr.bf16.mxu0 0
  %1872 = vmatpush1.bf16.msra.mxu0 0
  %1873 = vmatprep.subr.bf16.mxu0 0
  %1874 = vmatpush1.bf16.msra.mxu0 0
  %1875 = vmatprep.subr.bf16.mxu0 0
  %1876 = vmatpush1.bf16.msra.mxu0 0
  %1877 = vmatprep.subr.bf16.mxu0 0
  %1878 = vmatpush1.bf16.msra.mxu0 0
  %1879 = vmatprep.subr.bf16.mxu0 0
  %1880 = vmatpush1.bf16.msra.mxu0 0
  %1881 = vmatprep.subr.bf16.mxu0 0
  %1882 = vmatpush1.bf16.msra.mxu0 0
  %1883 = vmatprep.subr.bf16.mxu0 0
  %1884 = vmatpush1.bf16.msra.mxu0 0
  %1885 = vmatprep.subr.bf16.mxu0 0
  %1886 = vmatpush1.bf16.msra.mxu0 0
  %1887 = vmatprep.subr.bf16.mxu0 0
  %1888 = vmatpush1.bf16.msra.mxu0 0
  %1889 = vmatprep.subr.bf16.mxu0 0
  %1890 = vmatpush1.bf16.msra.mxu0 0
  %1891 = vmatprep.subr.bf16.mxu0 0
  %1892 = vmatpush1.bf16.msra.mxu0 0
  %1893 = vmatprep.mubr.bf16.mxu0 0
  %1894 = vmatmul.mubr.bf16.gmra.mrb[0].mxu0 %v1859
  %v1895 = vpop.f32.mrb[0].mxu0
  %v1896 = vadd.f32 %v1844, %v1895
  %v1897 = vpop.f32.mrb[0].mxu0
  %v1898 = vpop.f32.mrb[0].mxu0
  %v1899 = vadd.f32 %v1844, %v1898
  %v1900 = vpop.f32.mrb[0].mxu0
  %1901 = vdwg.mxu0
  %1902 = vst [vmem:[%s18] sm:$0xff] %v1896
  %1903 = vst [vmem:[%s18 + $0x8] sm:$0xff] %v1899
  // Predicated region
  $region74: #{bert_ner_forward.1} parent=0 // pred_check
    _
  $region75: #{bert_ner_forward.1} parent=0 // pred_check_branch
    %1905 = sbr.rel (0) target = $region77
  $region76: #{bert_ner_forward.1} parent=0 // pred_region
    _
  $region77: #{bert_ner_forward.1} parent=0 // pred_fallthru
    _
  // Predicated region
  $region78: #{bert_ner_forward.1} parent=0 // pred_check
    _
  $region79: #{bert_ner_forward.1} parent=0 // pred_check_branch
    %1907 = sbr.rel (0) target = $region81
  $region80: #{bert_ner_forward.1} parent=0 // pred_region
    _
  $region81: #{bert_ner_forward.1} parent=0 // pred_fallthru
    _

</llo_original>
